<compile_context>
chip_gen: v7x
topology: tpu7x:2x2x1
jax: 0.10.0
libtpu: 0.0.40
codegen_flags: <defaults>
</compile_context>

<pallas_src>
import functools

import jax
import jax.numpy as jnp
from jax.experimental import pallas as pl
from jax.experimental.pallas import tpu as pltpu

NZ = 128          # latent dim (nz in the PyTorch module)
HID = 128         # hidden width
NEG_SLOPE = 0.2   # LeakyReLU slope

MAX_TILE_B = 2048  # batch-tile cap; ~6 MiB VMEM live, far under scoped default


def _leaky_relu(v):
    # max(v, 0.2*v) == LeakyReLU(0.2): single vmax + vmul on the VPU.
    return jnp.maximum(v, NEG_SLOPE * v)


def _choose_tile_b(batch, max_tile=MAX_TILE_B):
    """Pick a lane-dense (multiple-of-128) batch tile.

    Prefers the largest tile up to `max_tile`, but shrinks so there are at
    least 2 grid steps whenever batch >= 256 (v7x megacore sharding)."""
    bp = ((batch + 127) // 128) * 128
    tile = min(max_tile, bp)
    if tile >= bp and bp >= 256:
        tile = max(128, (bp // 256) * 128)   # ~half the batch, 128-aligned
    return tile


def generator_kernel(x_ref,
                     w1_ref, b1_ref,
                     w2_ref, b2_ref,
                     w3_ref, b3_ref,
                     w4_ref, b4_ref,
                     w5_ref, b5_ref,
                     o_ref):
    """Whole MLP forward for one batch tile.

    x_ref : (tile_b, NZ)  f32
    w*_ref: (128, 128)    bf16 (layers 1-4), fed to the MXU
    b*_ref: (1, 128)      f32
    w5_ref: (128, 1)      f32 column of the final Linear(128 -> 1)
    b5_ref: (1, 1)        f32
    o_ref : (1, tile_b)   f32 lane-dense output row
    """
    h = x_ref[...]  # (tile_b, NZ) f32

    for w_ref, b_ref in ((w1_ref, b1_ref), (w2_ref, b2_ref),
                         (w3_ref, b3_ref), (w4_ref, b4_ref)):
        # bf16 MXU matmul with f32 accumulation; bias + LeakyReLU in f32 (VPU).
        h = jnp.dot(h.astype(jnp.bfloat16), w_ref[...],
                    preferred_element_type=jnp.float32) + b_ref[...]
        h = _leaky_relu(h)

    # Final 128 -> 1 layer, emitted lane-dense along the batch axis.
    # Transpose in bf16 (halves XLU traffic vs f32); multiply by the weight
    # column and reduce over the feature (sublane) axis in f32 for accuracy.
    ht = h.astype(jnp.bfloat16).T                              # (NZ, tile_b) bf16
    y = jnp.sum(ht.astype(jnp.float32) * w5_ref[...],          # f32 mul/acc
                axis=0, keepdims=True)                         # (1, tile_b)
    o_ref[...] = (y + b5_ref[...]).astype(o_ref.dtype)


@functools.partial(jax.jit, static_argnames=("tile_b",))
def generator_forward(x, prepared_params, tile_b=None):
    """x: (B, NZ) float32 -> (B, 1) float32, identical to the PyTorch Generator."""
    (w1, b1, w2, b2, w3, b3, w4, b4, w5c, b5) = prepared_params

    B = x.shape[0]
    if tile_b is None:
        tile_b = _choose_tile_b(B)            # static (shape-derived) under jit
    assert tile_b % 128 == 0, "tile_b must be a multiple of 128 (lane-dense output)"
    num_tiles = pl.cdiv(B, tile_b)            # partial last block: no jnp.pad pass

    weight_spec = pl.BlockSpec((HID, HID), lambda i: (0, 0))   # resident, no re-DMA
    bias_spec = pl.BlockSpec((1, HID), lambda i: (0, 0))

    out_row = pl.pallas_call(
        generator_kernel,
        out_shape=jax.ShapeDtypeStruct((1, B), jnp.float32),
        grid_spec=pltpu.PrefetchScalarGridSpec(
            num_scalar_prefetch=0,
            grid=(num_tiles,),
            in_specs=[
                pl.BlockSpec((tile_b, NZ), lambda i: (i, 0)),   # x tile
                weight_spec, bias_spec,                          # layer 1
                weight_spec, bias_spec,                          # layer 2
                weight_spec, bias_spec,                          # layer 3
                weight_spec, bias_spec,                          # layer 4
                pl.BlockSpec((HID, 1), lambda i: (0, 0)),        # layer 5 weight col
                pl.BlockSpec((1, 1), lambda i: (0, 0)),          # layer 5 bias
            ],
            out_specs=pl.BlockSpec((1, tile_b), lambda i: (0, i)),
        ),
        compiler_params=pltpu.CompilerParams(
            dimension_semantics=("parallel",)),   # shards grid steps across TCs (v7x)
    )(x, w1, b1, w2, b2, w3, b3, w4, b4, w5c, b5)

    return out_row.reshape(B, 1)  # row -> column, preserves batch order


def prepare_params(params):
    """One-time param prep (outside the per-call jit path):
    cast the four hidden-layer weights to bf16 for the MXU; keep biases and the
    final 128->1 column in f32 (they are used on the f32 VPU path)."""
    (w1, b1, w2, b2, w3, b3, w4, b4, w5, b5) = params
    bf16 = jnp.bfloat16
    return (w1.astype(bf16), b1,
            w2.astype(bf16), b2,
            w3.astype(bf16), b3,
            w4.astype(bf16), b4,
            w5.astype(jnp.float32),                # (128, 1)
            b5.reshape(1, 1).astype(jnp.float32))  # (1, 1)


def init_params(key):
    """Deterministic init mimicking nn.Linear shapes; weights stored as (in, out)."""
    dims = [(NZ, HID), (HID, HID), (HID, HID), (HID, HID), (HID, 1)]
    params = []
    for (fan_in, fan_out) in dims:
        key, kw, kb = jax.random.split(key, 3)
        bound = 1.0 / jnp.sqrt(fan_in)
        w = jax.random.uniform(kw, (fan_in, fan_out), jnp.float32, -bound, bound)
        b = jax.random.uniform(kb, (1, fan_out), jnp.float32, -bound, bound)
        params += [w, b]
    return tuple(params)


def reference_forward(x, params):
    """Plain-JAX f32 reference of the same MLP for the correctness check."""
    (w1, b1, w2, b2, w3, b3, w4, b4, w5, b5) = params
    h = x
    for w, b in ((w1, b1), (w2, b2), (w3, b3), (w4, b4)):
        h = h @ w + b
        h = jnp.where(h > 0, h, NEG_SLOPE * h)
    return h @ w5 + b5


if __name__ == "__main__":
    key = jax.random.PRNGKey(0)
    k_params, k_x = jax.random.split(key)

    params = init_params(k_params)
    prepared = prepare_params(params)

    batch = 256  # small demo batch; adaptive tile -> 128 rows x 2 grid steps
    x = jax.random.normal(k_x, (batch, NZ), jnp.float32)

    out = generator_forward(x, prepared)
    out = jax.block_until_ready(out)

    ref = reference_forward(x, params)
    assert out.shape == (batch, 1), out.shape
    # bf16 matmul inputs with f32 accumulation -> compare to f32 reference with
    # a bf16-appropriate tolerance.
    max_err = float(jnp.max(jnp.abs(out - ref)))
    assert jnp.allclose(out, ref, atol=5e-2, rtol=5e-2), f"mismatch: {max_err}"

    print("KERNEL_OK")
</pallas_src>

<mosaic_0001>
module attributes {stable_mosaic.version = 11 : i64} {
  func.func @generator_kernel(%arg0: i32, %arg1: memref<128x128xf32, #tpu.memory_space<vmem>>, %arg2: memref<128x128xbf16, #tpu.memory_space<vmem>>, %arg3: memref<1x128xf32, #tpu.memory_space<vmem>>, %arg4: memref<128x128xbf16, #tpu.memory_space<vmem>>, %arg5: memref<1x128xf32, #tpu.memory_space<vmem>>, %arg6: memref<128x128xbf16, #tpu.memory_space<vmem>>, %arg7: memref<1x128xf32, #tpu.memory_space<vmem>>, %arg8: memref<128x128xbf16, #tpu.memory_space<vmem>>, %arg9: memref<1x128xf32, #tpu.memory_space<vmem>>, %arg10: memref<128x1xf32, #tpu.memory_space<vmem>>, %arg11: memref<1x1xf32, #tpu.memory_space<vmem>>, %arg12: memref<1x128xf32, #tpu.memory_space<vmem>>) attributes {dimension_semantics = [#tpu.dimension_semantics<parallel>], iteration_bounds = array<i64: 2>, scalar_prefetch = 0 : i64, scratch_operands = 0 : i64, tpu.core_type = #tpu.core_type<tc>, window_params = [{transform_indices = @transform_0, window_bounds = array<i64: 128, 128>}, {pipeline_mode = #tpu.pipeline_mode<synchronous>, transform_indices = @transform_1, window_bounds = array<i64: 128, 128>}, {pipeline_mode = #tpu.pipeline_mode<synchronous>, transform_indices = @transform_2, window_bounds = array<i64: 1, 128>}, {pipeline_mode = #tpu.pipeline_mode<synchronous>, transform_indices = @transform_3, window_bounds = array<i64: 128, 128>}, {pipeline_mode = #tpu.pipeline_mode<synchronous>, transform_indices = @transform_4, window_bounds = array<i64: 1, 128>}, {pipeline_mode = #tpu.pipeline_mode<synchronous>, transform_indices = @transform_5, window_bounds = array<i64: 128, 128>}, {pipeline_mode = #tpu.pipeline_mode<synchronous>, transform_indices = @transform_6, window_bounds = array<i64: 1, 128>}, {pipeline_mode = #tpu.pipeline_mode<synchronous>, transform_indices = @transform_7, window_bounds = array<i64: 128, 128>}, {pipeline_mode = #tpu.pipeline_mode<synchronous>, transform_indices = @transform_8, window_bounds = array<i64: 1, 128>}, {pipeline_mode = #tpu.pipeline_mode<synchronous>, transform_indices = @transform_9, window_bounds = array<i64: 128, 1>}, {pipeline_mode = #tpu.pipeline_mode<synchronous>, transform_indices = @transform_10, window_bounds = array<i64: 1, 1>}, {transform_indices = @transform_11, window_bounds = array<i64: 1, 128>}]} {
    %c0 = arith.constant 0 : index
    %c0_0 = arith.constant 0 : index
    %0 = vector.load %arg1[%c0, %c0_0] : memref<128x128xf32, #tpu.memory_space<vmem>>, vector<128x128xf32>
    %1 = arith.truncf %0 : vector<128x128xf32> to vector<128x128xbf16>
    %c0_1 = arith.constant 0 : index
    %c0_2 = arith.constant 0 : index
    %2 = vector.load %arg2[%c0_1, %c0_2] : memref<128x128xbf16, #tpu.memory_space<vmem>>, vector<128x128xbf16>
    %cst = arith.constant dense<0.000000e+00> : vector<128x128xf32>
    %3 = tpu.matmul %1, %2, %cst {dimension_numbers = #tpu.dot_dimension_numbers<[1], [0], [0], [1], [0, 0, 1, 1], [], []>} : vector<128x128xbf16>, vector<128x128xbf16>, vector<128x128xf32> -> vector<128x128xf32>
    %c0_3 = arith.constant 0 : index
    %c0_4 = arith.constant 0 : index
    %4 = vector.load %arg3[%c0_3, %c0_4] : memref<1x128xf32, #tpu.memory_space<vmem>>, vector<1x128xf32>
    %5 = vector.broadcast %4 : vector<1x128xf32> to vector<128x128xf32>
    %6 = arith.addf %3, %5 : vector<128x128xf32>
    %cst_5 = arith.constant 2.000000e-01 : f32
    %7 = vector.broadcast %cst_5 : f32 to vector<128x128xf32>
    %8 = arith.mulf %7, %6 : vector<128x128xf32>
    %9 = arith.maximumf %6, %8 : vector<128x128xf32>
    %10 = arith.truncf %9 : vector<128x128xf32> to vector<128x128xbf16>
    %c0_6 = arith.constant 0 : index
    %c0_7 = arith.constant 0 : index
    %11 = vector.load %arg4[%c0_6, %c0_7] : memref<128x128xbf16, #tpu.memory_space<vmem>>, vector<128x128xbf16>
    %cst_8 = arith.constant dense<0.000000e+00> : vector<128x128xf32>
    %12 = tpu.matmul %10, %11, %cst_8 {dimension_numbers = #tpu.dot_dimension_numbers<[1], [0], [0], [1], [0, 0, 1, 1], [], []>} : vector<128x128xbf16>, vector<128x128xbf16>, vector<128x128xf32> -> vector<128x128xf32>
    %c0_9 = arith.constant 0 : index
    %c0_10 = arith.constant 0 : index
    %13 = vector.load %arg5[%c0_9, %c0_10] : memref<1x128xf32, #tpu.memory_space<vmem>>, vector<1x128xf32>
    %14 = vector.broadcast %13 : vector<1x128xf32> to vector<128x128xf32>
    %15 = arith.addf %12, %14 : vector<128x128xf32>
    %cst_11 = arith.constant 2.000000e-01 : f32
    %16 = vector.broadcast %cst_11 : f32 to vector<128x128xf32>
    %17 = arith.mulf %16, %15 : vector<128x128xf32>
    %18 = arith.maximumf %15, %17 : vector<128x128xf32>
    %19 = arith.truncf %18 : vector<128x128xf32> to vector<128x128xbf16>
    %c0_12 = arith.constant 0 : index
    %c0_13 = arith.constant 0 : index
    %20 = vector.load %arg6[%c0_12, %c0_13] : memref<128x128xbf16, #tpu.memory_space<vmem>>, vector<128x128xbf16>
    %cst_14 = arith.constant dense<0.000000e+00> : vector<128x128xf32>
    %21 = tpu.matmul %19, %20, %cst_14 {dimension_numbers = #tpu.dot_dimension_numbers<[1], [0], [0], [1], [0, 0, 1, 1], [], []>} : vector<128x128xbf16>, vector<128x128xbf16>, vector<128x128xf32> -> vector<128x128xf32>
    %c0_15 = arith.constant 0 : index
    %c0_16 = arith.constant 0 : index
    %22 = vector.load %arg7[%c0_15, %c0_16] : memref<1x128xf32, #tpu.memory_space<vmem>>, vector<1x128xf32>
    %23 = vector.broadcast %22 : vector<1x128xf32> to vector<128x128xf32>
    %24 = arith.addf %21, %23 : vector<128x128xf32>
    %cst_17 = arith.constant 2.000000e-01 : f32
    %25 = vector.broadcast %cst_17 : f32 to vector<128x128xf32>
    %26 = arith.mulf %25, %24 : vector<128x128xf32>
    %27 = arith.maximumf %24, %26 : vector<128x128xf32>
    %28 = arith.truncf %27 : vector<128x128xf32> to vector<128x128xbf16>
    %c0_18 = arith.constant 0 : index
    %c0_19 = arith.constant 0 : index
    %29 = vector.load %arg8[%c0_18, %c0_19] : memref<128x128xbf16, #tpu.memory_space<vmem>>, vector<128x128xbf16>
    %cst_20 = arith.constant dense<0.000000e+00> : vector<128x128xf32>
    %30 = tpu.matmul %28, %29, %cst_20 {dimension_numbers = #tpu.dot_dimension_numbers<[1], [0], [0], [1], [0, 0, 1, 1], [], []>} : vector<128x128xbf16>, vector<128x128xbf16>, vector<128x128xf32> -> vector<128x128xf32>
    %c0_21 = arith.constant 0 : index
    %c0_22 = arith.constant 0 : index
    %31 = vector.load %arg9[%c0_21, %c0_22] : memref<1x128xf32, #tpu.memory_space<vmem>>, vector<1x128xf32>
    %32 = vector.broadcast %31 : vector<1x128xf32> to vector<128x128xf32>
    %33 = arith.addf %30, %32 : vector<128x128xf32>
    %cst_23 = arith.constant 2.000000e-01 : f32
    %34 = vector.broadcast %cst_23 : f32 to vector<128x128xf32>
    %35 = arith.mulf %34, %33 : vector<128x128xf32>
    %36 = arith.maximumf %33, %35 : vector<128x128xf32>
    %37 = arith.truncf %36 : vector<128x128xf32> to vector<128x128xbf16>
    %38 = tpu.transpose %37, [1, 0] : vector<128x128xbf16> -> vector<128x128xbf16>
    %39 = arith.extf %38 : vector<128x128xbf16> to vector<128x128xf32>
    %c0_24 = arith.constant 0 : index
    %c0_25 = arith.constant 0 : index
    %40 = vector.load %arg10[%c0_24, %c0_25] : memref<128x1xf32, #tpu.memory_space<vmem>>, vector<128x1xf32>
    %41 = vector.broadcast %40 : vector<128x1xf32> to vector<128x128xf32>
    %42 = arith.mulf %39, %41 : vector<128x128xf32>
    %cst_26 = arith.constant dense<0.000000e+00> : vector<128xf32>
    %43 = vector.multi_reduction <add>, %42, %cst_26 [0] : vector<128x128xf32> to vector<128xf32>
    %44 = vector.shape_cast %43 : vector<128xf32> to vector<1x128xf32>
    %c0_27 = arith.constant 0 : index
    %c0_28 = arith.constant 0 : index
    %45 = vector.load %arg11[%c0_27, %c0_28] : memref<1x1xf32, #tpu.memory_space<vmem>>, vector<1x1xf32>
    %46 = vector.broadcast %45 : vector<1x1xf32> to vector<1x128xf32>
    %47 = arith.addf %44, %46 : vector<1x128xf32>
    %c0_29 = arith.constant 0 : index
    %c0_30 = arith.constant 0 : index
    %48 = vector.load %arg12[%c0_29, %c0_30] : memref<1x128xf32, #tpu.memory_space<vmem>>, vector<1x128xf32>
    tpu.vector_store %arg12[%c0_29, %c0_30], %47 {strides = array<i32>} : memref<1x128xf32, #tpu.memory_space<vmem>>, vector<1x128xf32>,
    return
  }
  func.func @transform_0(%arg0: i32) -> (i32, i32) {
    %c0_i32 = arith.constant 0 : i32
    %c0_i32_0 = arith.constant 0 : i32
    return %arg0, %c0_i32 : i32, i32
  }
  func.func @transform_1(%arg0: i32) -> (i32, i32) {
    %c0_i32 = arith.constant 0 : i32
    %c0_i32_0 = arith.constant 0 : i32
    %c0_i32_1 = arith.constant 0 : i32
    return %c0_i32, %c0_i32_0 : i32, i32
  }
  func.func @transform_2(%arg0: i32) -> (i32, i32) {
    %c0_i32 = arith.constant 0 : i32
    %c0_i32_0 = arith.constant 0 : i32
    %c0_i32_1 = arith.constant 0 : i32
    return %c0_i32, %c0_i32_0 : i32, i32
  }
  func.func @transform_3(%arg0: i32) -> (i32, i32) {
    %c0_i32 = arith.constant 0 : i32
    %c0_i32_0 = arith.constant 0 : i32
    %c0_i32_1 = arith.constant 0 : i32
    return %c0_i32, %c0_i32_0 : i32, i32
  }
  func.func @transform_4(%arg0: i32) -> (i32, i32) {
    %c0_i32 = arith.constant 0 : i32
    %c0_i32_0 = arith.constant 0 : i32
    %c0_i32_1 = arith.constant 0 : i32
    return %c0_i32, %c0_i32_0 : i32, i32
  }
  func.func @transform_5(%arg0: i32) -> (i32, i32) {
    %c0_i32 = arith.constant 0 : i32
    %c0_i32_0 = arith.constant 0 : i32
    %c0_i32_1 = arith.constant 0 : i32
    return %c0_i32, %c0_i32_0 : i32, i32
  }
  func.func @transform_6(%arg0: i32) -> (i32, i32) {
    %c0_i32 = arith.constant 0 : i32
    %c0_i32_0 = arith.constant 0 : i32
    %c0_i32_1 = arith.constant 0 : i32
    return %c0_i32, %c0_i32_0 : i32, i32
  }
  func.func @transform_7(%arg0: i32) -> (i32, i32) {
    %c0_i32 = arith.constant 0 : i32
    %c0_i32_0 = arith.constant 0 : i32
    %c0_i32_1 = arith.constant 0 : i32
    return %c0_i32, %c0_i32_0 : i32, i32
  }
  func.func @transform_8(%arg0: i32) -> (i32, i32) {
    %c0_i32 = arith.constant 0 : i32
    %c0_i32_0 = arith.constant 0 : i32
    %c0_i32_1 = arith.constant 0 : i32
    return %c0_i32, %c0_i32_0 : i32, i32
  }
  func.func @transform_9(%arg0: i32) -> (i32, i32) {
    %c0_i32 = arith.constant 0 : i32
    %c0_i32_0 = arith.constant 0 : i32
    %c0_i32_1 = arith.constant 0 : i32
    return %c0_i32, %c0_i32_0 : i32, i32
  }
  func.func @transform_10(%arg0: i32) -> (i32, i32) {
    %c0_i32 = arith.constant 0 : i32
    %c0_i32_0 = arith.constant 0 : i32
    %c0_i32_1 = arith.constant 0 : i32
    return %c0_i32, %c0_i32_0 : i32, i32
  }
  func.func @transform_11(%arg0: i32) -> (i32, i32) {
    %c0_i32 = arith.constant 0 : i32
    %c0_i32_0 = arith.constant 0 : i32
    return %c0_i32, %arg0 : i32, i32
  }
}

</mosaic_0001>

<llo_original>
// kernel: generator_forward.1
$region0: #{generator_forward.1}
  #allocation0 [shape = 'u32[]', space=smem, size = 0x4, offset = 0x4, fixed_abs, tag = 'smem constant byte address 0x4 - core index']
  #allocation1 [shape = 'u32[144,128]{1,0:T(1,128)}', space=vmem, size = 0x12000, scoped, tag = 'internal scratch']
  #allocation2 [shape = 'f32[1,1]{1,0:T(1,128)S(1)}', space=vmem, size = 0x200, scoped, tag = 'scoped memory for generator_forward.1']
  %s0 = inlined_call_operand.hbm [shape: f32[256,128], index: 0, kind: input, shape index: {}]
  %s1 = inlined_call_operand.vmem [shape: bf16[128,128], index: 1, kind: input, shape index: {}]
  %s2 = inlined_call_operand.vmem [shape: f32[1,128], index: 2, kind: input, shape index: {}]
  %s3 = inlined_call_operand.vmem [shape: bf16[128,128], index: 3, kind: input, shape index: {}]
  %s4 = inlined_call_operand.vmem [shape: f32[1,128], index: 4, kind: input, shape index: {}]
  %s5 = inlined_call_operand.hbm [shape: bf16[128,128], index: 5, kind: input, shape index: {}]
  %s6 = inlined_call_operand.vmem [shape: f32[1,128], index: 6, kind: input, shape index: {}]
  %s7 = inlined_call_operand.hbm [shape: bf16[128,128], index: 7, kind: input, shape index: {}]
  %s8 = inlined_call_operand.vmem [shape: f32[1,128], index: 8, kind: input, shape index: {}]
  %s9 = inlined_call_operand.vmem [shape: f32[128,1], index: 9, kind: input, shape index: {}]
  %s10 = inlined_call_operand.<no memory space> [shape: f32[1,1], index: 10, kind: input, shape index: {}]
  %s11 = inlined_call_operand.hbm [shape: f32[1,256], index: 11, kind: output, shape index: {}]
  %s12 = sld [smem:[#allocation0]]
  $region89: #{generator_forward.1} parent=0
    _
  %s14 = ssub.s32 1, %s12
  %s15 = scalar_select 0, %s14, %s12
  %v16 = vstv %s10
  %17 = vst [vmem:[#allocation2] sm:$0x1] %v16
  $region1: #{generator_forward.1} parent=0
    #allocation3 [shape = 'u8[131072]{0}', space=vmem, size = 0x20000, scoped, tag = 'input window, operand 0']
    #allocation4 [shape = 's32[2]{0}', space=sflag, size = 0x8, scoped, tag = 'scoped memory for generator_forward.1']
    #allocation5 [shape = 's32[2]{0}', space=sflag, size = 0x8, scoped, tag = 'scoped memory for generator_forward.1']
    #allocation6 [shape = 'u8[32768]{0}', space=vmem, size = 0x8000, scoped, tag = 'input window, operand 5, single buffered']
    #allocation7 [shape = 's32[1]{0}', space=sflag, size = 0x4, scoped, tag = 'scoped memory for generator_forward.1']
    #allocation8 [shape = 'u8[32768]{0}', space=vmem, size = 0x8000, scoped, tag = 'input window, operand 7, single buffered']
    #allocation9 [shape = 'u8[1024]{0}', space=vmem, size = 0x400, scoped, tag = 'output window, operand 0']
    %18 = vsyncpa [#allocation4], 0
    %s19 = scalar_lea.sflag [#allocation4], 1
    %20 = vsyncpa %s19, 0
    %21 = vsyncpa [#allocation7], 0
    %22 = vsyncpa [#allocation5], 0
    %s23 = scalar_lea.sflag [#allocation5], 1
    %24 = vsyncpa %s23, 0
    loop: start=0, step=1, limit=4
    $region2: #{generator_forward.1} parent=1 // loop_pre_header
      _
    $region3: #{generator_forward.1} parent=1 // loop_header
      %s26 = sphi 0, %s30
      %p27 = scmp.ge.s32.totalorder %s26, 4
      %s36 = sphi 0, %s38
      %s39 = sphi 0, %s36
      %s40 = sphi 0, %s39
      %s56 = sphi 0, %s40
      %s60 = sphi 0, %s60
      %s62 = sphi 0, %s60
      %s63 = sphi 0, %s62
      %s77 = sphi 0, %s63
      %s81 = sphi 0, %s81
      %s83 = sphi 0, %s81
      %s84 = sphi 0, %s83
      %s98 = sphi 0, %s84
      %s102 = sphi 0, %s102
      %s104 = sphi 0, %s102
      %s105 = sphi 0, %s104
      %s119 = sphi 0, %s105
      %s123 = sphi 0, %s123
      %s125 = sphi 0, %s123
      %s126 = sphi 0, %s125
      %s140 = sphi 0, %s126
      %s144 = sphi 0, %s144
      %s146 = sphi 0, %s144
      %s147 = sphi 0, %s146
      %s161 = sphi 0, %s147
      %s165 = sphi 0, %s165
      %s167 = sphi 0, %s165
      %s168 = sphi 0, %s167
      %s182 = sphi 0, %s168
      %s186 = sphi 0, %s186
      %s188 = sphi 0, %s186
      %s189 = sphi 0, %s188
      %s203 = sphi 0, %s189
      %s207 = sphi 0, %s207
      %s209 = sphi 0, %s207
      %s210 = sphi 0, %s209
      %s224 = sphi 0, %s210
      %s228 = sphi 0, %s228
      %s230 = sphi 0, %s228
      %s231 = sphi 0, %s230
      %s245 = sphi 0, %s231
      %s249 = sphi 0, %s249
      %s251 = sphi 0, %s249
      %s252 = sphi 0, %s251
      %s266 = sphi 0, %s252
      %s272 = sphi 0, %s274
      %s275 = sphi 0, %s272
      %s276 = sphi 0, %s275
      %s292 = sphi 0, %s276
    $region4: #{generator_forward.1} parent=1 // loop_header_branch
      %29 = sbr.rel (%p27) target = $region8
    $region5: #{generator_forward.1} parent=1 // loop_body
      %s31 = ssub.s32 %s26, 1
      %s32 = ssub.s32 %s26, 2
      %s33 = sadd.s32 %s26, 1
      %s34 = ssub.s32 %s26, %s33
      %p35 = scmp.eq.s32.totalorder %s34, 0
      %s37 = sadd.s32 %s36, 1
      %s38 = scalar_select %p35, %s36, %s37
      %p41 = pneg %p35
      %p42 = scmp.eq.s32.totalorder %s26, 1
      %p43 = por %p41, %p42
      %p44 = scmp.ne.s32.totalorder %s36, %s39
      %p45 = scmp.eq.s32.totalorder %s26, 0
      %p46 = por %p44, %p45
      %p47 = scmp.ne.s32.totalorder %s36, %s39
      %p48 = scmp.eq.s32.totalorder %s31, 1
      %p49 = por %p47, %p48
      %p50 = scmp.ne.s32.totalorder %s39, %s40
      %p51 = scmp.eq.s32.totalorder %s31, 0
      %p52 = por %p50, %p51
      %p53 = scmp.ne.s32.totalorder %s39, %s40
      %p54 = scmp.eq.s32.totalorder %s32, 1
      %p55 = por %p53, %p54
      %p57 = scmp.ne.s32.totalorder %s40, %s56
      %p58 = scmp.eq.s32.totalorder %s32, 0
      %p59 = por %p57, %p58
      %s61 = sadd.s32 %s60, 1
      %p64 = scmp.eq.s32.totalorder %s26, 1
      %p65 = scmp.ne.s32.totalorder %s60, %s62
      %p66 = scmp.eq.s32.totalorder %s26, 0
      %p67 = por %p65, %p66
      %p68 = scmp.ne.s32.totalorder %s60, %s62
      %p69 = scmp.eq.s32.totalorder %s31, 1
      %p70 = por %p68, %p69
      %p71 = scmp.ne.s32.totalorder %s62, %s63
      %p72 = scmp.eq.s32.totalorder %s31, 0
      %p73 = por %p71, %p72
      %p74 = scmp.ne.s32.totalorder %s62, %s63
      %p75 = scmp.eq.s32.totalorder %s32, 1
      %p76 = por %p74, %p75
      %p78 = scmp.ne.s32.totalorder %s63, %s77
      %p79 = scmp.eq.s32.totalorder %s32, 0
      %p80 = por %p78, %p79
      %s82 = sadd.s32 %s81, 1
      %p85 = scmp.eq.s32.totalorder %s26, 1
      %p86 = scmp.ne.s32.totalorder %s81, %s83
      %p87 = scmp.eq.s32.totalorder %s26, 0
      %p88 = por %p86, %p87
      %p89 = scmp.ne.s32.totalorder %s81, %s83
      %p90 = scmp.eq.s32.totalorder %s31, 1
      %p91 = por %p89, %p90
      %p92 = scmp.ne.s32.totalorder %s83, %s84
      %p93 = scmp.eq.s32.totalorder %s31, 0
      %p94 = por %p92, %p93
      %p95 = scmp.ne.s32.totalorder %s83, %s84
      %p96 = scmp.eq.s32.totalorder %s32, 1
      %p97 = por %p95, %p96
      %p99 = scmp.ne.s32.totalorder %s84, %s98
      %p100 = scmp.eq.s32.totalorder %s32, 0
      %p101 = por %p99, %p100
      %s103 = sadd.s32 %s102, 1
      %p106 = scmp.eq.s32.totalorder %s26, 1
      %p107 = scmp.ne.s32.totalorder %s102, %s104
      %p108 = scmp.eq.s32.totalorder %s26, 0
      %p109 = por %p107, %p108
      %p110 = scmp.ne.s32.totalorder %s102, %s104
      %p111 = scmp.eq.s32.totalorder %s31, 1
      %p112 = por %p110, %p111
      %p113 = scmp.ne.s32.totalorder %s104, %s105
      %p114 = scmp.eq.s32.totalorder %s31, 0
      %p115 = por %p113, %p114
      %p116 = scmp.ne.s32.totalorder %s104, %s105
      %p117 = scmp.eq.s32.totalorder %s32, 1
      %p118 = por %p116, %p117
      %p120 = scmp.ne.s32.totalorder %s105, %s119
      %p121 = scmp.eq.s32.totalorder %s32, 0
      %p122 = por %p120, %p121
      %s124 = sadd.s32 %s123, 1
      %p127 = scmp.eq.s32.totalorder %s26, 1
      %p128 = scmp.ne.s32.totalorder %s123, %s125
      %p129 = scmp.eq.s32.totalorder %s26, 0
      %p130 = por %p128, %p129
      %p131 = scmp.ne.s32.totalorder %s123, %s125
      %p132 = scmp.eq.s32.totalorder %s31, 1
      %p133 = por %p131, %p132
      %p134 = scmp.ne.s32.totalorder %s125, %s126
      %p135 = scmp.eq.s32.totalorder %s31, 0
      %p136 = por %p134, %p135
      %p137 = scmp.ne.s32.totalorder %s125, %s126
      %p138 = scmp.eq.s32.totalorder %s32, 1
      %p139 = por %p137, %p138
      %p141 = scmp.ne.s32.totalorder %s126, %s140
      %p142 = scmp.eq.s32.totalorder %s32, 0
      %p143 = por %p141, %p142
      %s145 = sadd.s32 %s144, 1
      %p148 = scmp.eq.s32.totalorder %s26, 1
      %p149 = scmp.ne.s32.totalorder %s144, %s146
      %p150 = scmp.eq.s32.totalorder %s26, 0
      %p151 = por %p149, %p150
      %p152 = scmp.ne.s32.totalorder %s144, %s146
      %p153 = scmp.eq.s32.totalorder %s31, 1
      %p154 = por %p152, %p153
      %p155 = scmp.ne.s32.totalorder %s146, %s147
      %p156 = scmp.eq.s32.totalorder %s31, 0
      %p157 = por %p155, %p156
      %p158 = scmp.ne.s32.totalorder %s146, %s147
      %p159 = scmp.eq.s32.totalorder %s32, 1
      %p160 = por %p158, %p159
      %p162 = scmp.ne.s32.totalorder %s147, %s161
      %p163 = scmp.eq.s32.totalorder %s32, 0
      %p164 = por %p162, %p163
      %s166 = sadd.s32 %s165, 1
      %p169 = scmp.eq.s32.totalorder %s26, 1
      %p170 = scmp.ne.s32.totalorder %s165, %s167
      %p171 = scmp.eq.s32.totalorder %s26, 0
      %p172 = por %p170, %p171
      %p173 = scmp.ne.s32.totalorder %s165, %s167
      %p174 = scmp.eq.s32.totalorder %s31, 1
      %p175 = por %p173, %p174
      %p176 = scmp.ne.s32.totalorder %s167, %s168
      %p177 = scmp.eq.s32.totalorder %s31, 0
      %p178 = por %p176, %p177
      %p179 = scmp.ne.s32.totalorder %s167, %s168
      %p180 = scmp.eq.s32.totalorder %s32, 1
      %p181 = por %p179, %p180
      %p183 = scmp.ne.s32.totalorder %s168, %s182
      %p184 = scmp.eq.s32.totalorder %s32, 0
      %p185 = por %p183, %p184
      %s187 = sadd.s32 %s186, 1
      %p190 = scmp.eq.s32.totalorder %s26, 1
      %p191 = scmp.ne.s32.totalorder %s186, %s188
      %p192 = scmp.eq.s32.totalorder %s26, 0
      %p193 = por %p191, %p192
      %p194 = scmp.ne.s32.totalorder %s186, %s188
      %p195 = scmp.eq.s32.totalorder %s31, 1
      %p196 = por %p194, %p195
      %p197 = scmp.ne.s32.totalorder %s188, %s189
      %p198 = scmp.eq.s32.totalorder %s31, 0
      %p199 = por %p197, %p198
      %p200 = scmp.ne.s32.totalorder %s188, %s189
      %p201 = scmp.eq.s32.totalorder %s32, 1
      %p202 = por %p200, %p201
      %p204 = scmp.ne.s32.totalorder %s189, %s203
      %p205 = scmp.eq.s32.totalorder %s32, 0
      %p206 = por %p204, %p205
      %s208 = sadd.s32 %s207, 1
      %p211 = scmp.eq.s32.totalorder %s26, 1
      %p212 = scmp.ne.s32.totalorder %s207, %s209
      %p213 = scmp.eq.s32.totalorder %s26, 0
      %p214 = por %p212, %p213
      %p215 = scmp.ne.s32.totalorder %s207, %s209
      %p216 = scmp.eq.s32.totalorder %s31, 1
      %p217 = por %p215, %p216
      %p218 = scmp.ne.s32.totalorder %s209, %s210
      %p219 = scmp.eq.s32.totalorder %s31, 0
      %p220 = por %p218, %p219
      %p221 = scmp.ne.s32.totalorder %s209, %s210
      %p222 = scmp.eq.s32.totalorder %s32, 1
      %p223 = por %p221, %p222
      %p225 = scmp.ne.s32.totalorder %s210, %s224
      %p226 = scmp.eq.s32.totalorder %s32, 0
      %p227 = por %p225, %p226
      %s229 = sadd.s32 %s228, 1
      %p232 = scmp.eq.s32.totalorder %s26, 1
      %p233 = scmp.ne.s32.totalorder %s228, %s230
      %p234 = scmp.eq.s32.totalorder %s26, 0
      %p235 = por %p233, %p234
      %p236 = scmp.ne.s32.totalorder %s228, %s230
      %p237 = scmp.eq.s32.totalorder %s31, 1
      %p238 = por %p236, %p237
      %p239 = scmp.ne.s32.totalorder %s230, %s231
      %p240 = scmp.eq.s32.totalorder %s31, 0
      %p241 = por %p239, %p240
      %p242 = scmp.ne.s32.totalorder %s230, %s231
      %p243 = scmp.eq.s32.totalorder %s32, 1
      %p244 = por %p242, %p243
      %p246 = scmp.ne.s32.totalorder %s231, %s245
      %p247 = scmp.eq.s32.totalorder %s32, 0
      %p248 = por %p246, %p247
      %s250 = sadd.s32 %s249, 1
      %p253 = scmp.eq.s32.totalorder %s26, 1
      %p254 = scmp.ne.s32.totalorder %s249, %s251
      %p255 = scmp.eq.s32.totalorder %s26, 0
      %p256 = por %p254, %p255
      %p257 = scmp.ne.s32.totalorder %s249, %s251
      %p258 = scmp.eq.s32.totalorder %s31, 1
      %p259 = por %p257, %p258
      %p260 = scmp.ne.s32.totalorder %s251, %s252
      %p261 = scmp.eq.s32.totalorder %s31, 0
      %p262 = por %p260, %p261
      %p263 = scmp.ne.s32.totalorder %s251, %s252
      %p264 = scmp.eq.s32.totalorder %s32, 1
      %p265 = por %p263, %p264
      %p267 = scmp.ne.s32.totalorder %s252, %s266
      %p268 = scmp.eq.s32.totalorder %s32, 0
      %p269 = por %p267, %p268
      %s270 = ssub.s32 %s26, %s33
      %p271 = scmp.eq.s32.totalorder %s270, 0
      %s273 = sadd.s32 %s272, 1
      %s274 = scalar_select %p271, %s272, %s273
      %p277 = pneg %p271
      %p278 = scmp.eq.s32.totalorder %s26, 1
      %p279 = por %p277, %p278
      %p280 = scmp.ne.s32.totalorder %s272, %s275
      %p281 = scmp.eq.s32.totalorder %s26, 0
      %p282 = por %p280, %p281
      %p283 = scmp.ne.s32.totalorder %s272, %s275
      %p284 = scmp.eq.s32.totalorder %s31, 1
      %p285 = por %p283, %p284
      %p286 = scmp.ne.s32.totalorder %s275, %s276
      %p287 = scmp.eq.s32.totalorder %s31, 0
      %p288 = por %p286, %p287
      %p289 = scmp.ne.s32.totalorder %s275, %s276
      %p290 = scmp.eq.s32.totalorder %s32, 1
      %p291 = por %p289, %p290
      %p293 = scmp.ne.s32.totalorder %s276, %s292
      %p294 = scmp.eq.s32.totalorder %s32, 0
      %p295 = por %p293, %p294
      %p296 = scmp.le.s32.totalorder 1, %s26
      %p297 = scmp.lt.s32.totalorder %s26, 3
      %p298 = pnand %p296, %p297
      %p299 = pneg %p298
      // Predicated region
      $region9: #{generator_forward.1} parent=5 // pred_check
        _
      $region10: #{generator_forward.1} parent=5 // pred_check_branch
        %301 = sbr.rel (%p298) target = $region12
      $region11: #{generator_forward.1} parent=5 // pred_region
        %s302 = ssub.s32 %s26, 1
        // Predicated region
        $region13: #{generator_forward.1} parent=11 // pred_check
          %p303 = pneg %p73
        $region14: #{generator_forward.1} parent=11 // pred_check_branch
          %305 = sbr.rel (%p303) target = $region16
        $region15: #{generator_forward.1} parent=11 // pred_region
          _
        $region16: #{generator_forward.1} parent=11 // pred_fallthru
          _
        // Predicated region
        $region17: #{generator_forward.1} parent=11 // pred_check
          %p306 = pneg %p94
        $region18: #{generator_forward.1} parent=11 // pred_check_branch
          %308 = sbr.rel (%p306) target = $region20
        $region19: #{generator_forward.1} parent=11 // pred_region
          _
        $region20: #{generator_forward.1} parent=11 // pred_fallthru
          _
        // Predicated region
        $region21: #{generator_forward.1} parent=11 // pred_check
          %p309 = pneg %p115
        $region22: #{generator_forward.1} parent=11 // pred_check_branch
          %311 = sbr.rel (%p309) target = $region24
        $region23: #{generator_forward.1} parent=11 // pred_region
          _
        $region24: #{generator_forward.1} parent=11 // pred_fallthru
          _
        // Predicated region
        $region25: #{generator_forward.1} parent=11 // pred_check
          %p312 = pneg %p136
        $region26: #{generator_forward.1} parent=11 // pred_check_branch
          %314 = sbr.rel (%p312) target = $region28
        $region27: #{generator_forward.1} parent=11 // pred_region
          _
        $region28: #{generator_forward.1} parent=11 // pred_fallthru
          _
        // Predicated region
        $region29: #{generator_forward.1} parent=11 // pred_check
          %p315 = pneg %p157
        $region30: #{generator_forward.1} parent=11 // pred_check_branch
          %317 = sbr.rel (%p315) target = $region32
        $region31: #{generator_forward.1} parent=11 // pred_region
          %s319 = ssub.s32 1024, 1024
          %320 = vsyncadd [#allocation7], %s319
          %s321 = sshll.u32 [#allocation6], 4
          %s322 = int_to_ptr.vmem [resolvable:$true] %s321
          %327 = dma.hbm_to_vmem [thread:$0]  %s5, 1024, %s322, [#allocation7], 64, 64, 4
        $region32: #{generator_forward.1} parent=11 // pred_fallthru
          _
        // Predicated region
        $region33: #{generator_forward.1} parent=11 // pred_check
          %p328 = pneg %p178
        $region34: #{generator_forward.1} parent=11 // pred_check_branch
          %330 = sbr.rel (%p328) target = $region36
        $region35: #{generator_forward.1} parent=11 // pred_region
          _
        $region36: #{generator_forward.1} parent=11 // pred_fallthru
          _
        // Predicated region
        $region37: #{generator_forward.1} parent=11 // pred_check
          %p331 = pneg %p199
        $region38: #{generator_forward.1} parent=11 // pred_check_branch
          %333 = sbr.rel (%p331) target = $region40
        $region39: #{generator_forward.1} parent=11 // pred_region
          %s335 = ssub.s32 1024, 1024
          %336 = vsyncadd [#allocation7], %s335
          %s337 = sshll.u32 [#allocation8], 4
          %s338 = int_to_ptr.vmem [resolvable:$true] %s337
          %343 = dma.hbm_to_vmem [thread:$0]  %s7, 1024, %s338, [#allocation7], 64, 64, 4
        $region40: #{generator_forward.1} parent=11 // pred_fallthru
          _
        // Predicated region
        $region41: #{generator_forward.1} parent=11 // pred_check
          %p344 = pneg %p220
        $region42: #{generator_forward.1} parent=11 // pred_check_branch
          %346 = sbr.rel (%p344) target = $region44
        $region43: #{generator_forward.1} parent=11 // pred_region
          _
        $region44: #{generator_forward.1} parent=11 // pred_fallthru
          _
        // Predicated region
        $region45: #{generator_forward.1} parent=11 // pred_check
          %p347 = pneg %p241
        $region46: #{generator_forward.1} parent=11 // pred_check_branch
          %349 = sbr.rel (%p347) target = $region48
        $region47: #{generator_forward.1} parent=11 // pred_region
          _
        $region48: #{generator_forward.1} parent=11 // pred_fallthru
          _
        // Predicated region
        $region49: #{generator_forward.1} parent=11 // pred_check
          %p350 = pneg %p262
        $region50: #{generator_forward.1} parent=11 // pred_check_branch
          %352 = sbr.rel (%p350) target = $region52
        $region51: #{generator_forward.1} parent=11 // pred_region
          _
        $region52: #{generator_forward.1} parent=11 // pred_fallthru
          _
      $region12: #{generator_forward.1} parent=5 // pred_fallthru
        _
      %p353 = scmp.lt.s32.totalorder %s26, 2
      // Predicated region
      $region53: #{generator_forward.1} parent=5 // pred_check
        %p354 = pneg %p353
      $region54: #{generator_forward.1} parent=5 // pred_check_branch
        %356 = sbr.rel (%p354) target = $region56
      $region55: #{generator_forward.1} parent=5 // pred_region
        // Predicated region
        $region57: #{generator_forward.1} parent=55 // pred_check
          %p357 = pneg %p46
        $region58: #{generator_forward.1} parent=55 // pred_check_branch
          %359 = sbr.rel (%p357) target = $region60
        $region59: #{generator_forward.1} parent=55 // pred_region
          %s360 = sand.u32 %s36, 1
          %s361 = scalar_lea.sflag [#allocation4], %s360
          %s362 = sand.u32 %s36, 1
          %s363 = smul.addr %s362, 128
          %s364 = scalar_lea.vmem [#allocation3], %s363
          %s365 = smul.u32 16, %s26
          %s367 = ssub.s32 2048, 2048
          %368 = vsyncadd %s361, %s367
          %s369 = smul.addr %s365, 128
          %s370 = scalar_lea.hbm %s0, %s369
          %s371 = sshll.u32 %s364, 4
          %s372 = int_to_ptr.vmem [resolvable:$true] %s371
          %377 = dma.hbm_to_vmem [thread:$0]  %s370, 2048, %s372, %s361, 128, 128, 8
        $region60: #{generator_forward.1} parent=55 // pred_fallthru
          _
      $region56: #{generator_forward.1} parent=5 // pred_fallthru
        _
      %p378 = scmp.le.s32.totalorder 1, %s26
      %p379 = scmp.lt.s32.totalorder %s26, 3
      %p380 = pnand %p378, %p379
      %p381 = pneg %p380
      // Predicated region
      $region61: #{generator_forward.1} parent=5 // pred_check
        _
      $region62: #{generator_forward.1} parent=5 // pred_check_branch
        %383 = sbr.rel (%p380) target = $region64
      $region63: #{generator_forward.1} parent=5 // pred_region
        %s384 = ssub.s32 %s26, 1
        %s385 = sand.u32 %s39, 1
        %s386 = scalar_lea.sflag [#allocation4], %s385
        %s387 = sand.u32 %s39, 1
        %s388 = smul.addr %s387, 128
        %s389 = scalar_lea.vmem [#allocation3], %s388
        // Predicated region
        $region65: #{generator_forward.1} parent=63 // pred_check
          %p390 = pneg %p52
        $region66: #{generator_forward.1} parent=63 // pred_check_branch
          %392 = sbr.rel (%p390) target = $region68
        $region67: #{generator_forward.1} parent=63 // pred_region
          %393 = dma.done %s386, 2048
        $region68: #{generator_forward.1} parent=63 // pred_fallthru
          _
        // Predicated region
        $region69: #{generator_forward.1} parent=63 // pred_check
          %p394 = pneg %p157
        $region70: #{generator_forward.1} parent=63 // pred_check_branch
          %396 = sbr.rel (%p394) target = $region72
        $region71: #{generator_forward.1} parent=63 // pred_region
          %397 = dma.done [#allocation7], 1024
        $region72: #{generator_forward.1} parent=63 // pred_fallthru
          _
        // Predicated region
        $region73: #{generator_forward.1} parent=63 // pred_check
          %p398 = pneg %p199
        $region74: #{generator_forward.1} parent=63 // pred_check_branch
          %400 = sbr.rel (%p398) target = $region76
        $region75: #{generator_forward.1} parent=63 // pred_region
          %401 = dma.done [#allocation7], 1024
        $region76: #{generator_forward.1} parent=63 // pred_fallthru
          _
        %s402 = sand.u32 %s39, 1
        %s403 = scalar_lea.sflag [#allocation4], %s402
        %s404 = sand.u32 %s39, 1
        %s405 = smul.addr %s404, 128
        %s406 = scalar_lea.vmem [#allocation3], %s405
        %p407 = pneg %p52
        %p408 = pneg %p49
        %p409 = pneg %p73
        %p410 = pneg %p70
        %p411 = pneg %p94
        %p412 = pneg %p91
        %p413 = pneg %p115
        %p414 = pneg %p112
        %p415 = pneg %p136
        %p416 = pneg %p133
        %p417 = pneg %p157
        %p418 = pneg %p154
        %p419 = pneg %p178
        %p420 = pneg %p175
        %p421 = pneg %p199
        %p422 = pneg %p196
        %p423 = pneg %p220
        %p424 = pneg %p217
        %p425 = pneg %p241
        %p426 = pneg %p238
        %p427 = pneg %p262
        %p428 = pneg %p259
        %p429 = pneg %p288
        %p430 = pneg %p285
        %s431 = sand.u32 %s275, 1
        %s432 = scalar_lea.sflag [#allocation5], %s431
        %s433 = sand.u32 %s275, 1
        %s434 = scalar_lea.vmem [#allocation9], %s433
        %s435 = smul.u32 16, %s31
        %v437 = vld [vmem:[%s389] sm:$0xff]
        %v438 = vld [vmem:[%s389 + $0x8] sm:$0xff]
        %v439 = vld [vmem:[%s389 + $0x10] sm:$0xff]
        %v440 = vld [vmem:[%s389 + $0x18] sm:$0xff]
        %v441 = vld [vmem:[%s389 + $0x20] sm:$0xff]
        %v442 = vld [vmem:[%s389 + $0x28] sm:$0xff]
        %v443 = vld [vmem:[%s389 + $0x30] sm:$0xff]
        %v444 = vld [vmem:[%s389 + $0x38] sm:$0xff]
        %v445 = vld [vmem:[%s389 + $0x40] sm:$0xff]
        %v446 = vld [vmem:[%s389 + $0x48] sm:$0xff]
        %v447 = vld [vmem:[%s389 + $0x50] sm:$0xff]
        %v448 = vld [vmem:[%s389 + $0x58] sm:$0xff]
        %v449 = vld [vmem:[%s389 + $0x60] sm:$0xff]
        %v450 = vld [vmem:[%s389 + $0x68] sm:$0xff]
        %v451 = vld [vmem:[%s389 + $0x70] sm:$0xff]
        %v452 = vld [vmem:[%s389 + $0x78] sm:$0xff]
        %v453 = vpack.c.bf16 %v438, %v437
        %v454 = vpack.c.bf16 %v440, %v439
        %v455 = vpack.c.bf16 %v442, %v441
        %v456 = vpack.c.bf16 %v444, %v443
        %v457 = vpack.c.bf16 %v446, %v445
        %v458 = vpack.c.bf16 %v448, %v447
        %v459 = vpack.c.bf16 %v450, %v449
        %v460 = vpack.c.bf16 %v452, %v451
        %v461 = vld [vmem:[%s1] sm:$0xf]
        %v462 = vld [vmem:[%s1 + $0x4] sm:$0xf]
        %v463 = vld [vmem:[%s1 + $0x8] sm:$0xf]
        %v464 = vld [vmem:[%s1 + $0xc] sm:$0xf]
        %v465 = vld [vmem:[%s1 + $0x10] sm:$0xf]
        %v466 = vld [vmem:[%s1 + $0x14] sm:$0xf]
        %v467 = vld [vmem:[%s1 + $0x18] sm:$0xf]
        %v468 = vld [vmem:[%s1 + $0x1c] sm:$0xf]
        %v469 = vld [vmem:[%s1 + $0x20] sm:$0xf]
        %v470 = vld [vmem:[%s1 + $0x24] sm:$0xf]
        %v471 = vld [vmem:[%s1 + $0x28] sm:$0xf]
        %v472 = vld [vmem:[%s1 + $0x2c] sm:$0xf]
        %v473 = vld [vmem:[%s1 + $0x30] sm:$0xf]
        %v474 = vld [vmem:[%s1 + $0x34] sm:$0xf]
        %v475 = vld [vmem:[%s1 + $0x38] sm:$0xf]
        %v476 = vld [vmem:[%s1 + $0x3c] sm:$0xf]
        %v477 = vld [vmem:[%s2] sm:$0x1]
        %v479 = vlaneseq
        %v480 = vshrl.u32 %v479, 7
        %v481 = vsub.s32 0, %v480
        %v482 = vrot.slane %v477, %v481
        %v500 = vunpack.c.l.b16 %v461
        %v501 = vunpack.c.l.b16 %v462
        %v502 = vunpack.c.l.b16 %v463
        %v503 = vunpack.c.l.b16 %v464
        %v504 = vunpack.c.l.b16 %v465
        %v505 = vunpack.c.l.b16 %v466
        %v506 = vunpack.c.l.b16 %v467
        %v507 = vunpack.c.l.b16 %v468
        %v508 = vunpack.c.l.b16 %v469
        %v509 = vunpack.c.l.b16 %v470
        %v510 = vunpack.c.l.b16 %v471
        %v511 = vunpack.c.l.b16 %v472
        %v512 = vunpack.c.l.b16 %v473
        %v513 = vunpack.c.l.b16 %v474
        %v514 = vunpack.c.l.b16 %v475
        %v515 = vunpack.c.l.b16 %v476
        %v516 = vpack.c.b16 %v501, %v500
        %v517 = vpack.c.b16 %v503, %v502
        %v518 = vpack.c.b16 %v505, %v504
        %v519 = vpack.c.b16 %v507, %v506
        %v520 = vpack.c.b16 %v509, %v508
        %v521 = vpack.c.b16 %v511, %v510
        %v522 = vpack.c.b16 %v513, %v512
        %v523 = vpack.c.b16 %v515, %v514
        %532 = vmatprep.subr.bf16.mxu0 0
        %533 = vmatpush1.bf16.msra.mxu0 %v516
        %534 = vmatprep.subr.bf16.mxu0 0
        %535 = vmatpush1.bf16.msra.mxu0 %v517
        %536 = vmatprep.subr.bf16.mxu0 0
        %537 = vmatpush1.bf16.msra.mxu0 %v518
        %538 = vmatprep.subr.bf16.mxu0 0
        %539 = vmatpush1.bf16.msra.mxu0 %v519
        %540 = vmatprep.subr.bf16.mxu0 0
        %541 = vmatpush1.bf16.msra.mxu0 %v520
        %542 = vmatprep.subr.bf16.mxu0 0
        %543 = vmatpush1.bf16.msra.mxu0 %v521
        %544 = vmatprep.subr.bf16.mxu0 0
        %545 = vmatpush1.bf16.msra.mxu0 %v522
        %546 = vmatprep.subr.bf16.mxu0 0
        %547 = vmatpush1.bf16.msra.mxu0 %v523
        %548 = vmatprep.subr.bf16.mxu0 0
        %549 = vmatpush1.bf16.msra.mxu0 0
        %550 = vmatprep.subr.bf16.mxu0 0
        %551 = vmatpush1.bf16.msra.mxu0 0
        %552 = vmatprep.subr.bf16.mxu0 0
        %553 = vmatpush1.bf16.msra.mxu0 0
        %554 = vmatprep.subr.bf16.mxu0 0
        %555 = vmatpush1.bf16.msra.mxu0 0
        %556 = vmatprep.subr.bf16.mxu0 0
        %557 = vmatpush1.bf16.msra.mxu0 0
        %558 = vmatprep.subr.bf16.mxu0 0
        %559 = vmatpush1.bf16.msra.mxu0 0
        %560 = vmatprep.subr.bf16.mxu0 0
        %561 = vmatpush1.bf16.msra.mxu0 0
        %562 = vmatprep.subr.bf16.mxu0 0
        %563 = vmatpush1.bf16.msra.mxu0 0
        %564 = vmatprep.mubr.bf16.mxu0 0
        %565 = vmatmul.mubr.bf16.gmra.mrb[0].mxu0 %v453
        %v566 = vpop.f32.mrb[0].mxu0
        %v567 = vadd.f32 %v482, %v566
        %v568 = vpop.f32.mrb[0].mxu0
        %v569 = vpop.f32.mrb[0].mxu0
        %v570 = vadd.f32 %v482, %v569
        %v571 = vpop.f32.mrb[0].mxu0
        %572 = vmatprep.mubr.bf16.mxu0 0
        %573 = vmatmul.mubr.bf16.gmra.mrb[0].mxu0 %v454
        %v574 = vpop.f32.mrb[0].mxu0
        %v575 = vadd.f32 %v482, %v574
        %v576 = vpop.f32.mrb[0].mxu0
        %v577 = vpop.f32.mrb[0].mxu0
        %v578 = vadd.f32 %v482, %v577
        %v579 = vpop.f32.mrb[0].mxu0
        %580 = vmatprep.mubr.bf16.mxu0 0
        %581 = vmatmul.mubr.bf16.gmra.mrb[0].mxu0 %v455
        %v582 = vpop.f32.mrb[0].mxu0
        %v583 = vadd.f32 %v482, %v582
        %v584 = vpop.f32.mrb[0].mxu0
        %v585 = vpop.f32.mrb[0].mxu0
        %v586 = vadd.f32 %v482, %v585
        %v587 = vpop.f32.mrb[0].mxu0
        %588 = vmatprep.mubr.bf16.mxu0 0
        %589 = vmatmul.mubr.bf16.gmra.mrb[0].mxu0 %v456
        %v590 = vpop.f32.mrb[0].mxu0
        %v591 = vadd.f32 %v482, %v590
        %v592 = vpop.f32.mrb[0].mxu0
        %v593 = vpop.f32.mrb[0].mxu0
        %v594 = vadd.f32 %v482, %v593
        %v595 = vpop.f32.mrb[0].mxu0
        %596 = vmatprep.mubr.bf16.mxu0 0
        %597 = vmatmul.mubr.bf16.gmra.mrb[0].mxu0 %v457
        %v598 = vpop.f32.mrb[0].mxu0
        %v599 = vadd.f32 %v482, %v598
        %v600 = vpop.f32.mrb[0].mxu0
        %v601 = vpop.f32.mrb[0].mxu0
        %v602 = vadd.f32 %v482, %v601
        %v603 = vpop.f32.mrb[0].mxu0
        %604 = vmatprep.mubr.bf16.mxu0 0
        %605 = vmatmul.mubr.bf16.gmra.mrb[0].mxu0 %v458
        %v606 = vpop.f32.mrb[0].mxu0
        %v607 = vadd.f32 %v482, %v606
        %v608 = vpop.f32.mrb[0].mxu0
        %v609 = vpop.f32.mrb[0].mxu0
        %v610 = vadd.f32 %v482, %v609
        %v611 = vpop.f32.mrb[0].mxu0
        %612 = vmatprep.mubr.bf16.mxu0 0
        %613 = vmatmul.mubr.bf16.gmra.mrb[0].mxu0 %v459
        %v614 = vpop.f32.mrb[0].mxu0
        %v615 = vadd.f32 %v482, %v614
        %v616 = vpop.f32.mrb[0].mxu0
        %v617 = vpop.f32.mrb[0].mxu0
        %v618 = vadd.f32 %v482, %v617
        %v619 = vpop.f32.mrb[0].mxu0
        %620 = vmatprep.mubr.bf16.mxu0 0
        %621 = vmatmul.mubr.bf16.gmra.mrb[0].mxu0 %v460
        %v622 = vpop.f32.mrb[0].mxu0
        %v623 = vadd.f32 %v482, %v622
        %v624 = vpop.f32.mrb[0].mxu0
        %v625 = vpop.f32.mrb[0].mxu0
        %v626 = vadd.f32 %v482, %v625
        %v627 = vpop.f32.mrb[0].mxu0
        %628 = vdwg.mxu0
        %v629 = vmul.f32 %v567, 0.2
        %v630 = vmul.f32 %v570, 0.2
        %v631 = vmul.f32 %v575, 0.2
        %v632 = vmul.f32 %v578, 0.2
        %v633 = vmul.f32 %v583, 0.2
        %v634 = vmul.f32 %v586, 0.2
        %v635 = vmul.f32 %v591, 0.2
        %v636 = vmul.f32 %v594, 0.2
        %v637 = vmul.f32 %v599, 0.2
        %v638 = vmul.f32 %v602, 0.2
        %v639 = vmul.f32 %v607, 0.2
        %v640 = vmul.f32 %v610, 0.2
        %v641 = vmul.f32 %v615, 0.2
        %v642 = vmul.f32 %v618, 0.2
        %v643 = vmul.f32 %v623, 0.2
        %v644 = vmul.f32 %v626, 0.2
        %v645 = vmax.f32 %v567, %v629
        %v646 = vmax.f32 %v570, %v630
        %v647 = vmax.f32 %v575, %v631
        %v648 = vmax.f32 %v578, %v632
        %v649 = vmax.f32 %v583, %v633
        %v650 = vmax.f32 %v586, %v634
        %v651 = vmax.f32 %v591, %v635
        %v652 = vmax.f32 %v594, %v636
        %v653 = vmax.f32 %v599, %v637
        %v654 = vmax.f32 %v602, %v638
        %v655 = vmax.f32 %v607, %v639
        %v656 = vmax.f32 %v610, %v640
        %v657 = vmax.f32 %v615, %v641
        %v658 = vmax.f32 %v618, %v642
        %v659 = vmax.f32 %v623, %v643
        %v660 = vmax.f32 %v626, %v644
        %v661 = vpack.c.bf16 %v646, %v645
        %v662 = vpack.c.bf16 %v648, %v647
        %v663 = vpack.c.bf16 %v650, %v649
        %v664 = vpack.c.bf16 %v652, %v651
        %v665 = vpack.c.bf16 %v654, %v653
        %v666 = vpack.c.bf16 %v656, %v655
        %v667 = vpack.c.bf16 %v658, %v657
        %v668 = vpack.c.bf16 %v660, %v659
        %v669 = vld [vmem:[%s3] sm:$0xf]
        %v670 = vld [vmem:[%s3 + $0x4] sm:$0xf]
        %v671 = vld [vmem:[%s3 + $0x8] sm:$0xf]
        %v672 = vld [vmem:[%s3 + $0xc] sm:$0xf]
        %v673 = vld [vmem:[%s3 + $0x10] sm:$0xf]
        %v674 = vld [vmem:[%s3 + $0x14] sm:$0xf]
        %v675 = vld [vmem:[%s3 + $0x18] sm:$0xf]
        %v676 = vld [vmem:[%s3 + $0x1c] sm:$0xf]
        %v677 = vld [vmem:[%s3 + $0x20] sm:$0xf]
        %v678 = vld [vmem:[%s3 + $0x24] sm:$0xf]
        %v679 = vld [vmem:[%s3 + $0x28] sm:$0xf]
        %v680 = vld [vmem:[%s3 + $0x2c] sm:$0xf]
        %v681 = vld [vmem:[%s3 + $0x30] sm:$0xf]
        %v682 = vld [vmem:[%s3 + $0x34] sm:$0xf]
        %v683 = vld [vmem:[%s3 + $0x38] sm:$0xf]
        %v684 = vld [vmem:[%s3 + $0x3c] sm:$0xf]
        %v685 = vld [vmem:[%s4] sm:$0x1]
        %v687 = vlaneseq
        %v688 = vshrl.u32 %v687, 7
        %v689 = vsub.s32 0, %v688
        %v690 = vrot.slane %v685, %v689
        %v708 = vunpack.c.l.b16 %v669
        %v709 = vunpack.c.l.b16 %v670
        %v710 = vunpack.c.l.b16 %v671
        %v711 = vunpack.c.l.b16 %v672
        %v712 = vunpack.c.l.b16 %v673
        %v713 = vunpack.c.l.b16 %v674
        %v714 = vunpack.c.l.b16 %v675
        %v715 = vunpack.c.l.b16 %v676
        %v716 = vunpack.c.l.b16 %v677
        %v717 = vunpack.c.l.b16 %v678
        %v718 = vunpack.c.l.b16 %v679
        %v719 = vunpack.c.l.b16 %v680
        %v720 = vunpack.c.l.b16 %v681
        %v721 = vunpack.c.l.b16 %v682
        %v722 = vunpack.c.l.b16 %v683
        %v723 = vunpack.c.l.b16 %v684
        %v724 = vpack.c.b16 %v709, %v708
        %v725 = vpack.c.b16 %v711, %v710
        %v726 = vpack.c.b16 %v713, %v712
        %v727 = vpack.c.b16 %v715, %v714
        %v728 = vpack.c.b16 %v717, %v716
        %v729 = vpack.c.b16 %v719, %v718
        %v730 = vpack.c.b16 %v721, %v720
        %v731 = vpack.c.b16 %v723, %v722
        %740 = vmatprep.subr.bf16.mxu0 0
        %741 = vmatpush1.bf16.msra.mxu0 %v724
        %742 = vmatprep.subr.bf16.mxu0 0
        %743 = vmatpush1.bf16.msra.mxu0 %v725
        %744 = vmatprep.subr.bf16.mxu0 0
        %745 = vmatpush1.bf16.msra.mxu0 %v726
        %746 = vmatprep.subr.bf16.mxu0 0
        %747 = vmatpush1.bf16.msra.mxu0 %v727
        %748 = vmatprep.subr.bf16.mxu0 0
        %749 = vmatpush1.bf16.msra.mxu0 %v728
        %750 = vmatprep.subr.bf16.mxu0 0
        %751 = vmatpush1.bf16.msra.mxu0 %v729
        %752 = vmatprep.subr.bf16.mxu0 0
        %753 = vmatpush1.bf16.msra.mxu0 %v730
        %754 = vmatprep.subr.bf16.mxu0 0
        %755 = vmatpush1.bf16.msra.mxu0 %v731
        %756 = vmatprep.subr.bf16.mxu0 0
        %757 = vmatpush1.bf16.msra.mxu0 0
        %758 = vmatprep.subr.bf16.mxu0 0
        %759 = vmatpush1.bf16.msra.mxu0 0
        %760 = vmatprep.subr.bf16.mxu0 0
        %761 = vmatpush1.bf16.msra.mxu0 0
        %762 = vmatprep.subr.bf16.mxu0 0
        %763 = vmatpush1.bf16.msra.mxu0 0
        %764 = vmatprep.subr.bf16.mxu0 0
        %765 = vmatpush1.bf16.msra.mxu0 0
        %766 = vmatprep.subr.bf16.mxu0 0
        %767 = vmatpush1.bf16.msra.mxu0 0
        %768 = vmatprep.subr.bf16.mxu0 0
        %769 = vmatpush1.bf16.msra.mxu0 0
        %770 = vmatprep.subr.bf16.mxu0 0
        %771 = vmatpush1.bf16.msra.mxu0 0
        %772 = vmatprep.mubr.bf16.mxu0 0
        %773 = vmatmul.mubr.bf16.gmra.mrb[0].mxu0 %v661
        %v774 = vpop.f32.mrb[0].mxu0
        %v775 = vadd.f32 %v690, %v774
        %v776 = vpop.f32.mrb[0].mxu0
        %v777 = vpop.f32.mrb[0].mxu0
        %v778 = vadd.f32 %v690, %v777
        %v779 = vpop.f32.mrb[0].mxu0
        %780 = vmatprep.mubr.bf16.mxu0 0
        %781 = vmatmul.mubr.bf16.gmra.mrb[0].mxu0 %v662
        %v782 = vpop.f32.mrb[0].mxu0
        %v783 = vadd.f32 %v690, %v782
        %v784 = vpop.f32.mrb[0].mxu0
        %v785 = vpop.f32.mrb[0].mxu0
        %v786 = vadd.f32 %v690, %v785
        %v787 = vpop.f32.mrb[0].mxu0
        %788 = vmatprep.mubr.bf16.mxu0 0
        %789 = vmatmul.mubr.bf16.gmra.mrb[0].mxu0 %v663
        %v790 = vpop.f32.mrb[0].mxu0
        %v791 = vadd.f32 %v690, %v790
        %v792 = vpop.f32.mrb[0].mxu0
        %v793 = vpop.f32.mrb[0].mxu0
        %v794 = vadd.f32 %v690, %v793
        %v795 = vpop.f32.mrb[0].mxu0
        %796 = vmatprep.mubr.bf16.mxu0 0
        %797 = vmatmul.mubr.bf16.gmra.mrb[0].mxu0 %v664
        %v798 = vpop.f32.mrb[0].mxu0
        %v799 = vadd.f32 %v690, %v798
        %v800 = vpop.f32.mrb[0].mxu0
        %v801 = vpop.f32.mrb[0].mxu0
        %v802 = vadd.f32 %v690, %v801
        %v803 = vpop.f32.mrb[0].mxu0
        %804 = vmatprep.mubr.bf16.mxu0 0
        %805 = vmatmul.mubr.bf16.gmra.mrb[0].mxu0 %v665
        %v806 = vpop.f32.mrb[0].mxu0
        %v807 = vadd.f32 %v690, %v806
        %v808 = vpop.f32.mrb[0].mxu0
        %v809 = vpop.f32.mrb[0].mxu0
        %v810 = vadd.f32 %v690, %v809
        %v811 = vpop.f32.mrb[0].mxu0
        %812 = vmatprep.mubr.bf16.mxu0 0
        %813 = vmatmul.mubr.bf16.gmra.mrb[0].mxu0 %v666
        %v814 = vpop.f32.mrb[0].mxu0
        %v815 = vadd.f32 %v690, %v814
        %v816 = vpop.f32.mrb[0].mxu0
        %v817 = vpop.f32.mrb[0].mxu0
        %v818 = vadd.f32 %v690, %v817
        %v819 = vpop.f32.mrb[0].mxu0
        %820 = vmatprep.mubr.bf16.mxu0 0
        %821 = vmatmul.mubr.bf16.gmra.mrb[0].mxu0 %v667
        %v822 = vpop.f32.mrb[0].mxu0
        %v823 = vadd.f32 %v690, %v822
        %v824 = vpop.f32.mrb[0].mxu0
        %v825 = vpop.f32.mrb[0].mxu0
        %v826 = vadd.f32 %v690, %v825
        %v827 = vpop.f32.mrb[0].mxu0
        %828 = vmatprep.mubr.bf16.mxu0 0
        %829 = vmatmul.mubr.bf16.gmra.mrb[0].mxu0 %v668
        %v830 = vpop.f32.mrb[0].mxu0
        %v831 = vadd.f32 %v690, %v830
        %v832 = vpop.f32.mrb[0].mxu0
        %v833 = vpop.f32.mrb[0].mxu0
        %v834 = vadd.f32 %v690, %v833
        %v835 = vpop.f32.mrb[0].mxu0
        %836 = vdwg.mxu0
        %v837 = vmul.f32 %v775, 0.2
        %v838 = vmul.f32 %v778, 0.2
        %v839 = vmul.f32 %v783, 0.2
        %v840 = vmul.f32 %v786, 0.2
        %v841 = vmul.f32 %v791, 0.2
        %v842 = vmul.f32 %v794, 0.2
        %v843 = vmul.f32 %v799, 0.2
        %v844 = vmul.f32 %v802, 0.2
        %v845 = vmul.f32 %v807, 0.2
        %v846 = vmul.f32 %v810, 0.2
        %v847 = vmul.f32 %v815, 0.2
        %v848 = vmul.f32 %v818, 0.2
        %v849 = vmul.f32 %v823, 0.2
        %v850 = vmul.f32 %v826, 0.2
        %v851 = vmul.f32 %v831, 0.2
        %v852 = vmul.f32 %v834, 0.2
        %v853 = vmax.f32 %v775, %v837
        %v854 = vmax.f32 %v778, %v838
        %v855 = vmax.f32 %v783, %v839
        %v856 = vmax.f32 %v786, %v840
        %v857 = vmax.f32 %v791, %v841
        %v858 = vmax.f32 %v794, %v842
        %v859 = vmax.f32 %v799, %v843
        %v860 = vmax.f32 %v802, %v844
        %v861 = vmax.f32 %v807, %v845
        %v862 = vmax.f32 %v810, %v846
        %v863 = vmax.f32 %v815, %v847
        %v864 = vmax.f32 %v818, %v848
        %v865 = vmax.f32 %v823, %v849
        %v866 = vmax.f32 %v826, %v850
        %v867 = vmax.f32 %v831, %v851
        %v868 = vmax.f32 %v834, %v852
        %v869 = vpack.c.bf16 %v854, %v853
        %v870 = vpack.c.bf16 %v856, %v855
        %v871 = vpack.c.bf16 %v858, %v857
        %v872 = vpack.c.bf16 %v860, %v859
        %v873 = vpack.c.bf16 %v862, %v861
        %v874 = vpack.c.bf16 %v864, %v863
        %v875 = vpack.c.bf16 %v866, %v865
        %v876 = vpack.c.bf16 %v868, %v867
        %v877 = vld [vmem:[#allocation6] sm:$0xf]
        %v878 = vld [vmem:[#allocation6 + $0x4] sm:$0xf]
        %v879 = vld [vmem:[#allocation6 + $0x8] sm:$0xf]
        %v880 = vld [vmem:[#allocation6 + $0xc] sm:$0xf]
        %v881 = vld [vmem:[#allocation6 + $0x10] sm:$0xf]
        %v882 = vld [vmem:[#allocation6 + $0x14] sm:$0xf]
        %v883 = vld [vmem:[#allocation6 + $0x18] sm:$0xf]
        %v884 = vld [vmem:[#allocation6 + $0x1c] sm:$0xf]
        %v885 = vld [vmem:[#allocation6 + $0x20] sm:$0xf]
        %v886 = vld [vmem:[#allocation6 + $0x24] sm:$0xf]
        %v887 = vld [vmem:[#allocation6 + $0x28] sm:$0xf]
        %v888 = vld [vmem:[#allocation6 + $0x2c] sm:$0xf]
        %v889 = vld [vmem:[#allocation6 + $0x30] sm:$0xf]
        %v890 = vld [vmem:[#allocation6 + $0x34] sm:$0xf]
        %v891 = vld [vmem:[#allocation6 + $0x38] sm:$0xf]
        %v892 = vld [vmem:[#allocation6 + $0x3c] sm:$0xf]
        %v893 = vld [vmem:[%s6] sm:$0x1]
        %v895 = vlaneseq
        %v896 = vshrl.u32 %v895, 7
        %v897 = vsub.s32 0, %v896
        %v898 = vrot.slane %v893, %v897
        %v916 = vunpack.c.l.b16 %v877
        %v917 = vunpack.c.l.b16 %v878
        %v918 = vunpack.c.l.b16 %v879
        %v919 = vunpack.c.l.b16 %v880
        %v920 = vunpack.c.l.b16 %v881
        %v921 = vunpack.c.l.b16 %v882
        %v922 = vunpack.c.l.b16 %v883
        %v923 = vunpack.c.l.b16 %v884
        %v924 = vunpack.c.l.b16 %v885
        %v925 = vunpack.c.l.b16 %v886
        %v926 = vunpack.c.l.b16 %v887
        %v927 = vunpack.c.l.b16 %v888
        %v928 = vunpack.c.l.b16 %v889
        %v929 = vunpack.c.l.b16 %v890
        %v930 = vunpack.c.l.b16 %v891
        %v931 = vunpack.c.l.b16 %v892
        %v932 = vpack.c.b16 %v917, %v916
        %v933 = vpack.c.b16 %v919, %v918
        %v934 = vpack.c.b16 %v921, %v920
        %v935 = vpack.c.b16 %v923, %v922
        %v936 = vpack.c.b16 %v925, %v924
        %v937 = vpack.c.b16 %v927, %v926
        %v938 = vpack.c.b16 %v929, %v928
        %v939 = vpack.c.b16 %v931, %v930
        %948 = vmatprep.subr.bf16.mxu0 0
        %949 = vmatpush1.bf16.msra.mxu0 %v932
        %950 = vmatprep.subr.bf16.mxu0 0
        %951 = vmatpush1.bf16.msra.mxu0 %v933
        %952 = vmatprep.subr.bf16.mxu0 0
        %953 = vmatpush1.bf16.msra.mxu0 %v934
        %954 = vmatprep.subr.bf16.mxu0 0
        %955 = vmatpush1.bf16.msra.mxu0 %v935
        %956 = vmatprep.subr.bf16.mxu0 0
        %957 = vmatpush1.bf16.msra.mxu0 %v936
        %958 = vmatprep.subr.bf16.mxu0 0
        %959 = vmatpush1.bf16.msra.mxu0 %v937
        %960 = vmatprep.subr.bf16.mxu0 0
        %961 = vmatpush1.bf16.msra.mxu0 %v938
        %962 = vmatprep.subr.bf16.mxu0 0
        %963 = vmatpush1.bf16.msra.mxu0 %v939
        %964 = vmatprep.subr.bf16.mxu0 0
        %965 = vmatpush1.bf16.msra.mxu0 0
        %966 = vmatprep.subr.bf16.mxu0 0
        %967 = vmatpush1.bf16.msra.mxu0 0
        %968 = vmatprep.subr.bf16.mxu0 0
        %969 = vmatpush1.bf16.msra.mxu0 0
        %970 = vmatprep.subr.bf16.mxu0 0
        %971 = vmatpush1.bf16.msra.mxu0 0
        %972 = vmatprep.subr.bf16.mxu0 0
        %973 = vmatpush1.bf16.msra.mxu0 0
        %974 = vmatprep.subr.bf16.mxu0 0
        %975 = vmatpush1.bf16.msra.mxu0 0
        %976 = vmatprep.subr.bf16.mxu0 0
        %977 = vmatpush1.bf16.msra.mxu0 0
        %978 = vmatprep.subr.bf16.mxu0 0
        %979 = vmatpush1.bf16.msra.mxu0 0
        %980 = vmatprep.mubr.bf16.mxu0 0
        %981 = vmatmul.mubr.bf16.gmra.mrb[0].mxu0 %v869
        %v982 = vpop.f32.mrb[0].mxu0
        %v983 = vadd.f32 %v898, %v982
        %v984 = vpop.f32.mrb[0].mxu0
        %v985 = vpop.f32.mrb[0].mxu0
        %v986 = vadd.f32 %v898, %v985
        %v987 = vpop.f32.mrb[0].mxu0
        %988 = vmatprep.mubr.bf16.mxu0 0
        %989 = vmatmul.mubr.bf16.gmra.mrb[0].mxu0 %v870
        %v990 = vpop.f32.mrb[0].mxu0
        %v991 = vadd.f32 %v898, %v990
        %v992 = vpop.f32.mrb[0].mxu0
        %v993 = vpop.f32.mrb[0].mxu0
        %v994 = vadd.f32 %v898, %v993
        %v995 = vpop.f32.mrb[0].mxu0
        %996 = vmatprep.mubr.bf16.mxu0 0
        %997 = vmatmul.mubr.bf16.gmra.mrb[0].mxu0 %v871
        %v998 = vpop.f32.mrb[0].mxu0
        %v999 = vadd.f32 %v898, %v998
        %v1000 = vpop.f32.mrb[0].mxu0
        %v1001 = vpop.f32.mrb[0].mxu0
        %v1002 = vadd.f32 %v898, %v1001
        %v1003 = vpop.f32.mrb[0].mxu0
        %1004 = vmatprep.mubr.bf16.mxu0 0
        %1005 = vmatmul.mubr.bf16.gmra.mrb[0].mxu0 %v872
        %v1006 = vpop.f32.mrb[0].mxu0
        %v1007 = vadd.f32 %v898, %v1006
        %v1008 = vpop.f32.mrb[0].mxu0
        %v1009 = vpop.f32.mrb[0].mxu0
        %v1010 = vadd.f32 %v898, %v1009
        %v1011 = vpop.f32.mrb[0].mxu0
        %1012 = vmatprep.mubr.bf16.mxu0 0
        %1013 = vmatmul.mubr.bf16.gmra.mrb[0].mxu0 %v873
        %v1014 = vpop.f32.mrb[0].mxu0
        %v1015 = vadd.f32 %v898, %v1014
        %v1016 = vpop.f32.mrb[0].mxu0
        %v1017 = vpop.f32.mrb[0].mxu0
        %v1018 = vadd.f32 %v898, %v1017
        %v1019 = vpop.f32.mrb[0].mxu0
        %1020 = vmatprep.mubr.bf16.mxu0 0
        %1021 = vmatmul.mubr.bf16.gmra.mrb[0].mxu0 %v874
        %v1022 = vpop.f32.mrb[0].mxu0
        %v1023 = vadd.f32 %v898, %v1022
        %v1024 = vpop.f32.mrb[0].mxu0
        %v1025 = vpop.f32.mrb[0].mxu0
        %v1026 = vadd.f32 %v898, %v1025
        %v1027 = vpop.f32.mrb[0].mxu0
        %1028 = vmatprep.mubr.bf16.mxu0 0
        %1029 = vmatmul.mubr.bf16.gmra.mrb[0].mxu0 %v875
        %v1030 = vpop.f32.mrb[0].mxu0
        %v1031 = vadd.f32 %v898, %v1030
        %v1032 = vpop.f32.mrb[0].mxu0
        %v1033 = vpop.f32.mrb[0].mxu0
        %v1034 = vadd.f32 %v898, %v1033
        %v1035 = vpop.f32.mrb[0].mxu0
        %1036 = vmatprep.mubr.bf16.mxu0 0
        %1037 = vmatmul.mubr.bf16.gmra.mrb[0].mxu0 %v876
        %v1038 = vpop.f32.mrb[0].mxu0
        %v1039 = vadd.f32 %v898, %v1038
        %v1040 = vpop.f32.mrb[0].mxu0
        %v1041 = vpop.f32.mrb[0].mxu0
        %v1042 = vadd.f32 %v898, %v1041
        %v1043 = vpop.f32.mrb[0].mxu0
        %1044 = vdwg.mxu0
        %v1045 = vmul.f32 %v983, 0.2
        %v1046 = vmul.f32 %v986, 0.2
        %v1047 = vmul.f32 %v991, 0.2
        %v1048 = vmul.f32 %v994, 0.2
        %v1049 = vmul.f32 %v999, 0.2
        %v1050 = vmul.f32 %v1002, 0.2
        %v1051 = vmul.f32 %v1007, 0.2
        %v1052 = vmul.f32 %v1010, 0.2
        %v1053 = vmul.f32 %v1015, 0.2
        %v1054 = vmul.f32 %v1018, 0.2
        %v1055 = vmul.f32 %v1023, 0.2
        %v1056 = vmul.f32 %v1026, 0.2
        %v1057 = vmul.f32 %v1031, 0.2
        %v1058 = vmul.f32 %v1034, 0.2
        %v1059 = vmul.f32 %v1039, 0.2
        %v1060 = vmul.f32 %v1042, 0.2
        %v1061 = vmax.f32 %v983, %v1045
        %v1062 = vmax.f32 %v986, %v1046
        %v1063 = vmax.f32 %v991, %v1047
        %v1064 = vmax.f32 %v994, %v1048
        %v1065 = vmax.f32 %v999, %v1049
        %v1066 = vmax.f32 %v1002, %v1050
        %v1067 = vmax.f32 %v1007, %v1051
        %v1068 = vmax.f32 %v1010, %v1052
        %v1069 = vmax.f32 %v1015, %v1053
        %v1070 = vmax.f32 %v1018, %v1054
        %v1071 = vmax.f32 %v1023, %v1055
        %v1072 = vmax.f32 %v1026, %v1056
        %v1073 = vmax.f32 %v1031, %v1057
        %v1074 = vmax.f32 %v1034, %v1058
        %v1075 = vmax.f32 %v1039, %v1059
        %v1076 = vmax.f32 %v1042, %v1060
        %v1077 = vpack.c.bf16 %v1062, %v1061
        %v1078 = vpack.c.bf16 %v1064, %v1063
        %v1079 = vpack.c.bf16 %v1066, %v1065
        %v1080 = vpack.c.bf16 %v1068, %v1067
        %v1081 = vpack.c.bf16 %v1070, %v1069
        %v1082 = vpack.c.bf16 %v1072, %v1071
        %v1083 = vpack.c.bf16 %v1074, %v1073
        %v1084 = vpack.c.bf16 %v1076, %v1075
        %v1085 = vld [vmem:[#allocation8] sm:$0xf]
        %v1086 = vld [vmem:[#allocation8 + $0x4] sm:$0xf]
        %v1087 = vld [vmem:[#allocation8 + $0x8] sm:$0xf]
        %v1088 = vld [vmem:[#allocation8 + $0xc] sm:$0xf]
        %v1089 = vld [vmem:[#allocation8 + $0x10] sm:$0xf]
        %v1090 = vld [vmem:[#allocation8 + $0x14] sm:$0xf]
        %v1091 = vld [vmem:[#allocation8 + $0x18] sm:$0xf]
        %v1092 = vld [vmem:[#allocation8 + $0x1c] sm:$0xf]
        %v1093 = vld [vmem:[#allocation8 + $0x20] sm:$0xf]
        %v1094 = vld [vmem:[#allocation8 + $0x24] sm:$0xf]
        %v1095 = vld [vmem:[#allocation8 + $0x28] sm:$0xf]
        %v1096 = vld [vmem:[#allocation8 + $0x2c] sm:$0xf]
        %v1097 = vld [vmem:[#allocation8 + $0x30] sm:$0xf]
        %v1098 = vld [vmem:[#allocation8 + $0x34] sm:$0xf]
        %v1099 = vld [vmem:[#allocation8 + $0x38] sm:$0xf]
        %v1100 = vld [vmem:[#allocation8 + $0x3c] sm:$0xf]
        %v1101 = vld [vmem:[%s8] sm:$0x1]
        %v1103 = vlaneseq
        %v1104 = vshrl.u32 %v1103, 7
        %v1105 = vsub.s32 0, %v1104
        %v1106 = vrot.slane %v1101, %v1105
        %v1124 = vunpack.c.l.b16 %v1085
        %v1125 = vunpack.c.l.b16 %v1086
        %v1126 = vunpack.c.l.b16 %v1087
        %v1127 = vunpack.c.l.b16 %v1088
        %v1128 = vunpack.c.l.b16 %v1089
        %v1129 = vunpack.c.l.b16 %v1090
        %v1130 = vunpack.c.l.b16 %v1091
        %v1131 = vunpack.c.l.b16 %v1092
        %v1132 = vunpack.c.l.b16 %v1093
        %v1133 = vunpack.c.l.b16 %v1094
        %v1134 = vunpack.c.l.b16 %v1095
        %v1135 = vunpack.c.l.b16 %v1096
        %v1136 = vunpack.c.l.b16 %v1097
        %v1137 = vunpack.c.l.b16 %v1098
        %v1138 = vunpack.c.l.b16 %v1099
        %v1139 = vunpack.c.l.b16 %v1100
        %v1140 = vpack.c.b16 %v1125, %v1124
        %v1141 = vpack.c.b16 %v1127, %v1126
        %v1142 = vpack.c.b16 %v1129, %v1128
        %v1143 = vpack.c.b16 %v1131, %v1130
        %v1144 = vpack.c.b16 %v1133, %v1132
        %v1145 = vpack.c.b16 %v1135, %v1134
        %v1146 = vpack.c.b16 %v1137, %v1136
        %v1147 = vpack.c.b16 %v1139, %v1138
        %1156 = vmatprep.subr.bf16.mxu0 0
        %1157 = vmatpush1.bf16.msra.mxu0 %v1140
        %1158 = vmatprep.subr.bf16.mxu0 0
        %1159 = vmatpush1.bf16.msra.mxu0 %v1141
        %1160 = vmatprep.subr.bf16.mxu0 0
        %1161 = vmatpush1.bf16.msra.mxu0 %v1142
        %1162 = vmatprep.subr.bf16.mxu0 0
        %1163 = vmatpush1.bf16.msra.mxu0 %v1143
        %1164 = vmatprep.subr.bf16.mxu0 0
        %1165 = vmatpush1.bf16.msra.mxu0 %v1144
        %1166 = vmatprep.subr.bf16.mxu0 0
        %1167 = vmatpush1.bf16.msra.mxu0 %v1145
        %1168 = vmatprep.subr.bf16.mxu0 0
        %1169 = vmatpush1.bf16.msra.mxu0 %v1146
        %1170 = vmatprep.subr.bf16.mxu0 0
        %1171 = vmatpush1.bf16.msra.mxu0 %v1147
        %1172 = vmatprep.subr.bf16.mxu0 0
        %1173 = vmatpush1.bf16.msra.mxu0 0
        %1174 = vmatprep.subr.bf16.mxu0 0
        %1175 = vmatpush1.bf16.msra.mxu0 0
        %1176 = vmatprep.subr.bf16.mxu0 0
        %1177 = vmatpush1.bf16.msra.mxu0 0
        %1178 = vmatprep.subr.bf16.mxu0 0
        %1179 = vmatpush1.bf16.msra.mxu0 0
        %1180 = vmatprep.subr.bf16.mxu0 0
        %1181 = vmatpush1.bf16.msra.mxu0 0
        %1182 = vmatprep.subr.bf16.mxu0 0
        %1183 = vmatpush1.bf16.msra.mxu0 0
        %1184 = vmatprep.subr.bf16.mxu0 0
        %1185 = vmatpush1.bf16.msra.mxu0 0
        %1186 = vmatprep.subr.bf16.mxu0 0
        %1187 = vmatpush1.bf16.msra.mxu0 0
        %1188 = vmatprep.mubr.bf16.mxu0 0
        %1189 = vmatmul.mubr.bf16.gmra.mrb[0].mxu0 %v1077
        %v1190 = vpop.f32.mrb[0].mxu0
        %v1191 = vadd.f32 %v1106, %v1190
        %v1192 = vpop.f32.mrb[0].mxu0
        %v1193 = vpop.f32.mrb[0].mxu0
        %v1194 = vadd.f32 %v1106, %v1193
        %v1195 = vpop.f32.mrb[0].mxu0
        %1196 = vmatprep.mubr.bf16.mxu0 0
        %1197 = vmatmul.mubr.bf16.gmra.mrb[0].mxu0 %v1078
        %v1198 = vpop.f32.mrb[0].mxu0
        %v1199 = vadd.f32 %v1106, %v1198
        %v1200 = vpop.f32.mrb[0].mxu0
        %v1201 = vpop.f32.mrb[0].mxu0
        %v1202 = vadd.f32 %v1106, %v1201
        %v1203 = vpop.f32.mrb[0].mxu0
        %1204 = vmatprep.mubr.bf16.mxu0 0
        %1205 = vmatmul.mubr.bf16.gmra.mrb[0].mxu0 %v1079
        %v1206 = vpop.f32.mrb[0].mxu0
        %v1207 = vadd.f32 %v1106, %v1206
        %v1208 = vpop.f32.mrb[0].mxu0
        %v1209 = vpop.f32.mrb[0].mxu0
        %v1210 = vadd.f32 %v1106, %v1209
        %v1211 = vpop.f32.mrb[0].mxu0
        %1212 = vmatprep.mubr.bf16.mxu0 0
        %1213 = vmatmul.mubr.bf16.gmra.mrb[0].mxu0 %v1080
        %v1214 = vpop.f32.mrb[0].mxu0
        %v1215 = vadd.f32 %v1106, %v1214
        %v1216 = vpop.f32.mrb[0].mxu0
        %v1217 = vpop.f32.mrb[0].mxu0
        %v1218 = vadd.f32 %v1106, %v1217
        %v1219 = vpop.f32.mrb[0].mxu0
        %1220 = vmatprep.mubr.bf16.mxu0 0
        %1221 = vmatmul.mubr.bf16.gmra.mrb[0].mxu0 %v1081
        %v1222 = vpop.f32.mrb[0].mxu0
        %v1223 = vadd.f32 %v1106, %v1222
        %v1224 = vpop.f32.mrb[0].mxu0
        %v1225 = vpop.f32.mrb[0].mxu0
        %v1226 = vadd.f32 %v1106, %v1225
        %v1227 = vpop.f32.mrb[0].mxu0
        %1228 = vmatprep.mubr.bf16.mxu0 0
        %1229 = vmatmul.mubr.bf16.gmra.mrb[0].mxu0 %v1082
        %v1230 = vpop.f32.mrb[0].mxu0
        %v1231 = vadd.f32 %v1106, %v1230
        %v1232 = vpop.f32.mrb[0].mxu0
        %v1233 = vpop.f32.mrb[0].mxu0
        %v1234 = vadd.f32 %v1106, %v1233
        %v1235 = vpop.f32.mrb[0].mxu0
        %1236 = vmatprep.mubr.bf16.mxu0 0
        %1237 = vmatmul.mubr.bf16.gmra.mrb[0].mxu0 %v1083
        %v1238 = vpop.f32.mrb[0].mxu0
        %v1239 = vadd.f32 %v1106, %v1238
        %v1240 = vpop.f32.mrb[0].mxu0
        %v1241 = vpop.f32.mrb[0].mxu0
        %v1242 = vadd.f32 %v1106, %v1241
        %v1243 = vpop.f32.mrb[0].mxu0
        %1244 = vmatprep.mubr.bf16.mxu0 0
        %1245 = vmatmul.mubr.bf16.gmra.mrb[0].mxu0 %v1084
        %v1246 = vpop.f32.mrb[0].mxu0
        %v1247 = vadd.f32 %v1106, %v1246
        %v1248 = vpop.f32.mrb[0].mxu0
        %v1249 = vpop.f32.mrb[0].mxu0
        %v1250 = vadd.f32 %v1106, %v1249
        %v1251 = vpop.f32.mrb[0].mxu0
        %1252 = vdwg.mxu0
        %v1253 = vmul.f32 %v1191, 0.2
        %v1254 = vmul.f32 %v1194, 0.2
        %v1255 = vmul.f32 %v1199, 0.2
        %v1256 = vmul.f32 %v1202, 0.2
        %v1257 = vmul.f32 %v1207, 0.2
        %v1258 = vmul.f32 %v1210, 0.2
        %v1259 = vmul.f32 %v1215, 0.2
        %v1260 = vmul.f32 %v1218, 0.2
        %v1261 = vmul.f32 %v1223, 0.2
        %v1262 = vmul.f32 %v1226, 0.2
        %v1263 = vmul.f32 %v1231, 0.2
        %v1264 = vmul.f32 %v1234, 0.2
        %v1265 = vmul.f32 %v1239, 0.2
        %v1266 = vmul.f32 %v1242, 0.2
        %v1267 = vmul.f32 %v1247, 0.2
        %v1268 = vmul.f32 %v1250, 0.2
        %v1269 = vmax.f32 %v1191, %v1253
        %v1270 = vmax.f32 %v1194, %v1254
        %v1271 = vmax.f32 %v1199, %v1255
        %v1272 = vmax.f32 %v1202, %v1256
        %v1273 = vmax.f32 %v1207, %v1257
        %v1274 = vmax.f32 %v1210, %v1258
        %v1275 = vmax.f32 %v1215, %v1259
        %v1276 = vmax.f32 %v1218, %v1260
        %v1277 = vmax.f32 %v1223, %v1261
        %v1278 = vmax.f32 %v1226, %v1262
        %v1279 = vmax.f32 %v1231, %v1263
        %v1280 = vmax.f32 %v1234, %v1264
        %v1281 = vmax.f32 %v1239, %v1265
        %v1282 = vmax.f32 %v1242, %v1266
        %v1283 = vmax.f32 %v1247, %v1267
        %v1284 = vmax.f32 %v1250, %v1268
        %v1285 = vpack.c.bf16 %v1270, %v1269
        %v1286 = vpack.c.bf16 %v1272, %v1271
        %v1287 = vpack.c.bf16 %v1274, %v1273
        %v1288 = vpack.c.bf16 %v1276, %v1275
        %v1289 = vpack.c.bf16 %v1278, %v1277
        %v1290 = vpack.c.bf16 %v1280, %v1279
        %v1291 = vpack.c.bf16 %v1282, %v1281
        %v1292 = vpack.c.bf16 %v1284, %v1283
        %1293 = vxpose.xlu0.c.b16.start [1/8] %v1285, 128
        %1294 = vxpose.xlu0.c.b16.cont [2/8] %v1286, 128
        %1295 = vxpose.xlu0.c.b16.cont [3/8] %v1287, 128
        %1296 = vxpose.xlu0.c.b16.cont [4/8] %v1288, 128
        %1297 = vxpose.xlu0.c.b16.cont [5/8] %v1289, 128
        %1298 = vxpose.xlu0.c.b16.cont [6/8] %v1290, 128
        %1299 = vxpose.xlu0.c.b16.cont [7/8] %v1291, 128
        %1300 = vxpose.xlu0.c.b16.end [8/8] %v1292, 128
        %v1301 = vpop.trf.xlu0
        %v1302 = vpop.trf.xlu0
        %v1303 = vpop.trf.xlu0
        %v1304 = vpop.trf.xlu0
        %v1305 = vpop.trf.xlu0
        %v1306 = vpop.trf.xlu0
        %v1307 = vpop.trf.xlu0
        %v1308 = vpop.trf.xlu0
        %v1309 = vunpack.c.l.bf16 %v1301
        %v1310 = vunpack.c.h.bf16 %v1301
        %v1311 = vunpack.c.l.bf16 %v1302
        %v1312 = vunpack.c.h.bf16 %v1302
        %v1313 = vunpack.c.l.bf16 %v1303
        %v1314 = vunpack.c.h.bf16 %v1303
        %v1315 = vunpack.c.l.bf16 %v1304
        %v1316 = vunpack.c.h.bf16 %v1304
        %v1317 = vunpack.c.l.bf16 %v1305
        %v1318 = vunpack.c.h.bf16 %v1305
        %v1319 = vunpack.c.l.bf16 %v1306
        %v1320 = vunpack.c.h.bf16 %v1306
        %v1321 = vunpack.c.l.bf16 %v1307
        %v1322 = vunpack.c.h.bf16 %v1307
        %v1323 = vunpack.c.l.bf16 %v1308
        %v1324 = vunpack.c.h.bf16 %v1308
        %v1325 = vld [vmem:[%s9] sm:$0xff]
        %v1326 = vld [vmem:[%s9 + $0x8] sm:$0xff]
        %v1327 = vld [vmem:[%s9 + $0x10] sm:$0xff]
        %v1328 = vld [vmem:[%s9 + $0x18] sm:$0xff]
        %v1329 = vld [vmem:[%s9 + $0x20] sm:$0xff]
        %v1330 = vld [vmem:[%s9 + $0x28] sm:$0xff]
        %v1331 = vld [vmem:[%s9 + $0x30] sm:$0xff]
        %v1332 = vld [vmem:[%s9 + $0x38] sm:$0xff]
        %v1333 = vld [vmem:[%s9 + $0x40] sm:$0xff]
        %v1334 = vld [vmem:[%s9 + $0x48] sm:$0xff]
        %v1335 = vld [vmem:[%s9 + $0x50] sm:$0xff]
        %v1336 = vld [vmem:[%s9 + $0x58] sm:$0xff]
        %v1337 = vld [vmem:[%s9 + $0x60] sm:$0xff]
        %v1338 = vld [vmem:[%s9 + $0x68] sm:$0xff]
        %v1339 = vld [vmem:[%s9 + $0x70] sm:$0xff]
        %v1340 = vld [vmem:[%s9 + $0x78] sm:$0xff]
        %1342 = vset.pattern.permute.xlu0 0
        %1343 = vperm.xlu0 %1342, %v1325
        %v1344 = vpop.permute.xlu0 %1343
        %1347 = vset.pattern.permute.xlu0 0
        %1348 = vperm.xlu0 %1347, %v1326
        %v1349 = vpop.permute.xlu0 %1348
        %1352 = vset.pattern.permute.xlu0 0
        %1353 = vperm.xlu0 %1352, %v1327
        %v1354 = vpop.permute.xlu0 %1353
        %1357 = vset.pattern.permute.xlu0 0
        %1358 = vperm.xlu0 %1357, %v1328
        %v1359 = vpop.permute.xlu0 %1358
        %1362 = vset.pattern.permute.xlu0 0
        %1363 = vperm.xlu0 %1362, %v1329
        %v1364 = vpop.permute.xlu0 %1363
        %1367 = vset.pattern.permute.xlu0 0
        %1368 = vperm.xlu0 %1367, %v1330
        %v1369 = vpop.permute.xlu0 %1368
        %1372 = vset.pattern.permute.xlu0 0
        %1373 = vperm.xlu0 %1372, %v1331
        %v1374 = vpop.permute.xlu0 %1373
        %1377 = vset.pattern.permute.xlu0 0
        %1378 = vperm.xlu0 %1377, %v1332
        %v1379 = vpop.permute.xlu0 %1378
        %1382 = vset.pattern.permute.xlu0 0
        %1383 = vperm.xlu0 %1382, %v1333
        %v1384 = vpop.permute.xlu0 %1383
        %1387 = vset.pattern.permute.xlu0 0
        %1388 = vperm.xlu0 %1387, %v1334
        %v1389 = vpop.permute.xlu0 %1388
        %1392 = vset.pattern.permute.xlu0 0
        %1393 = vperm.xlu0 %1392, %v1335
        %v1394 = vpop.permute.xlu0 %1393
        %1397 = vset.pattern.permute.xlu0 0
        %1398 = vperm.xlu0 %1397, %v1336
        %v1399 = vpop.permute.xlu0 %1398
        %1402 = vset.pattern.permute.xlu0 0
        %1403 = vperm.xlu0 %1402, %v1337
        %v1404 = vpop.permute.xlu0 %1403
        %1407 = vset.pattern.permute.xlu0 0
        %1408 = vperm.xlu0 %1407, %v1338
        %v1409 = vpop.permute.xlu0 %1408
        %1412 = vset.pattern.permute.xlu0 0
        %1413 = vperm.xlu0 %1412, %v1339
        %v1414 = vpop.permute.xlu0 %1413
        %1417 = vset.pattern.permute.xlu0 0
        %1418 = vperm.xlu0 %1417, %v1340
        %v1419 = vpop.permute.xlu0 %1418
        %v1421 = vmul.f32 %v1309, %v1344
        %v1422 = vmul.f32 %v1310, %v1349
        %v1423 = vmul.f32 %v1311, %v1354
        %v1424 = vmul.f32 %v1312, %v1359
        %v1425 = vmul.f32 %v1313, %v1364
        %v1426 = vmul.f32 %v1314, %v1369
        %v1427 = vmul.f32 %v1315, %v1374
        %v1428 = vmul.f32 %v1316, %v1379
        %v1429 = vmul.f32 %v1317, %v1384
        %v1430 = vmul.f32 %v1318, %v1389
        %v1431 = vmul.f32 %v1319, %v1394
        %v1432 = vmul.f32 %v1320, %v1399
        %v1433 = vmul.f32 %v1321, %v1404
        %v1434 = vmul.f32 %v1322, %v1409
        %v1435 = vmul.f32 %v1323, %v1414
        %v1436 = vmul.f32 %v1324, %v1419
        %v1437 = vadd.f32 %v1421, %v1422
        %v1438 = vadd.f32 %v1437, %v1423
        %v1439 = vadd.f32 %v1438, %v1424
        %v1440 = vadd.f32 %v1439, %v1425
        %v1441 = vadd.f32 %v1440, %v1426
        %v1442 = vadd.f32 %v1441, %v1427
        %v1443 = vadd.f32 %v1442, %v1428
        %v1444 = vadd.f32 %v1443, %v1429
        %v1445 = vadd.f32 %v1444, %v1430
        %v1446 = vadd.f32 %v1445, %v1431
        %v1447 = vadd.f32 %v1446, %v1432
        %v1448 = vadd.f32 %v1447, %v1433
        %v1449 = vadd.f32 %v1448, %v1434
        %v1450 = vadd.f32 %v1449, %v1435
        %v1451 = vadd.f32 %v1450, %v1436
        %v1452 = vrot.slane %v1451, 4
        %v1453 = vadd.f32 %v1451, %v1452
        %v1454 = vrot.slane %v1453, 2
        %v1455 = vadd.f32 %v1453, %v1454
        %v1456 = vrot.slane %v1455, 1
        %v1457 = vadd.f32 %v1455, %v1456
        %v1458 = vld [vmem:[#allocation2] sm:$0x1]
        %1460 = vset.pattern.permute.xlu0 0
        %1461 = vperm.xlu0 %1460, %v1458
        %v1462 = vpop.permute.xlu0 %1461
        %v1464 = vlaneseq
        %v1465 = vshrl.u32 %v1464, 7
        %v1466 = vsub.s32 0, %v1465
        %v1467 = vrot.slane %v1462, %v1466
        %v1468 = vadd.f32 %v1457, %v1467
        %1469 = vst [vmem:[%s434] sm:$0x1] %v1468
        %s1470 = sand.u32 %s275, 1
        %s1471 = scalar_lea.sflag [#allocation5], %s1470
        %s1472 = sand.u32 %s275, 1
        %s1473 = scalar_lea.vmem [#allocation9], %s1472
        // Predicated region
        $region77: #{generator_forward.1} parent=63 // pred_check
          %p1474 = pneg %p285
        $region78: #{generator_forward.1} parent=63 // pred_check_branch
          %1476 = sbr.rel (%p1474) target = $region80
        $region79: #{generator_forward.1} parent=63 // pred_region
          %s1478 = ssub.s32 16, 16
          %1479 = vsyncadd %s1471, %s1478
          %s1480 = smul.addr %s31, 16
          %s1481 = scalar_lea.hbm %s11, %s1480
          %s1483 = sshll.u32 %s1473, 4
          %s1484 = int_to_ptr.vmem [resolvable:$true] %s1483
          %1486 = dma.vmem_to_hbm [thread:$0]  %s1484, 16, %s1481, %s1471
        $region80: #{generator_forward.1} parent=63 // pred_fallthru
          _
      $region64: #{generator_forward.1} parent=5 // pred_fallthru
        _
      %p1487 = scmp.le.s32.totalorder 2, %s26
      // Predicated region
      $region81: #{generator_forward.1} parent=5 // pred_check
        %p1488 = pneg %p1487
      $region82: #{generator_forward.1} parent=5 // pred_check_branch
        %1490 = sbr.rel (%p1488) target = $region84
      $region83: #{generator_forward.1} parent=5 // pred_region
        %s1491 = ssub.s32 %s26, 2
        // Predicated region
        $region85: #{generator_forward.1} parent=83 // pred_check
          %p1492 = pneg %p291
        $region86: #{generator_forward.1} parent=83 // pred_check_branch
          %1494 = sbr.rel (%p1492) target = $region88
        $region87: #{generator_forward.1} parent=83 // pred_region
          %s1495 = sand.u32 %s276, 1
          %s1496 = scalar_lea.sflag [#allocation5], %s1495
          %s1497 = sand.u32 %s276, 1
          %s1498 = scalar_lea.vmem [#allocation9], %s1497
          %1499 = dma.done %s1496, 16
        $region88: #{generator_forward.1} parent=83 // pred_fallthru
          _
      $region84: #{generator_forward.1} parent=5 // pred_fallthru
        _
    $region6: #{generator_forward.1} parent=1 // loop_footer
      %s30 = sadd.s32 1, %s26
    $region7: #{generator_forward.1} parent=1 // loop_footer_branch
      %25 = sbr.rel target = $region3
    $region8: #{generator_forward.1} parent=1 // loop_exit
      _
    %1500 = vsyncpa [#allocation4], 1
    %s1501 = scalar_lea.sflag [#allocation4], 1
    %1502 = vsyncpa %s1501, 1
    %1503 = vsyncpa [#allocation7], 1
    %1504 = vsyncpa [#allocation5], 1
    %s1505 = scalar_lea.sflag [#allocation5], 1
    %1506 = vsyncpa %s1505, 1

</llo_original>
